<compile_context>
chip_gen: v7x
topology: tpu7x:2x2x1
jax: 0.10.0
libtpu: 0.0.40
codegen_flags: <defaults>
</compile_context>

<pallas_src>
import numpy as np
import jax
import jax.numpy as jnp
from jax.experimental import pallas as pl
from jax.experimental.pallas import tpu as pltpu

EPS = 1e-5


# ------------------------------ fused Pallas kernel --------------------------

def make_fused_kernel(reps, has_shortcut, strides):
    """Build the fused XceptionBlock kernel for `reps` separable-conv layers.

    Ref layout (per batch element, all lane-dense slabs):
      x_ref : (1, H, W*Cin)
      per rep i: R_i (3, Ho_i, Hin_i), M_i (3, Win_i*Ci_i, Wo_i*Cout),
                 b_i (1, Wo_i*Cout)
      shortcut (optional): Ms (W*Cin, Wo*Cout), bs (1, Wo*Cout)
                 (its row subsample == rep-0 R[1] rows, reused in-kernel)
      o_ref : (1, Ho, Wo*Cout)
    """

    def kernel(*refs):
        x_ref, o_ref = refs[0], refs[-1]
        wrefs = refs[1:-1]

        x0 = x_ref[0]                      # (H, W*Cin) lane-dense slab
        cur = x0
        rows_mid0 = x0                     # overwritten by rep-0, di==1 rows
        k = 0
        for r in range(reps):
            R_ref, M_ref, b_ref = wrefs[k], wrefs[k + 1], wrefs[k + 2]
            k += 3
            Ho = R_ref.shape[1]
            L = M_ref.shape[2]
            acc = jnp.zeros((Ho, L), jnp.float32)
            # 3 vertical taps: R[di] selects (strided, shifted, zero-padded)
            # rows; M[di] applies the 3 horizontal taps * depthwise weights *
            # (pointwise weights folded with BN scale) in one matmul.
            for di in range(3):
                if di == 1 and strides[r] == 1:
                    rows = cur             # R[1] == identity for stride-1 reps
                else:
                    rows = jnp.dot(R_ref[di], cur,
                                   preferred_element_type=jnp.float32)
                if r == 0 and di == 1:
                    rows_mid0 = rows       # strided row subsample of x0
                acc = acc + jnp.dot(rows, M_ref[di],
                                    preferred_element_type=jnp.float32)
            # folded (dw bias + pw bias + BN shift), then ReLU
            cur = jnp.maximum(acc + b_ref[...], 0.0)

        if has_shortcut:
            Ms_ref, bs_ref = wrefs[k], wrefs[k + 1]
            # shortcut row-subsample == rep-0 R[1] rows (reused, no extra matmul)
            sc = jnp.dot(rows_mid0, Ms_ref[...],
                         preferred_element_type=jnp.float32) + bs_ref[...]
        else:
            sc = x0                         # identity shortcut (shapes match)

        o_ref[0] = cur + sc

    return kernel


# --------------------- trace-time folding of weights/BN ----------------------

def _bn_scale_shift(bn):
    scale = bn["gamma"] / jnp.sqrt(bn["var"] + EPS)
    shift = bn["beta"] - bn["mean"] * scale
    return scale, shift


def _conv_out(n, k, s, p):
    return (n + 2 * p - k) // s + 1


def build_layer_mats(layer, stride, Hin, Win, Ci):
    """Fold one SeparableConv2d + BN(eval) + ReLU layer into (R, M, b).

    Acting on lane-dense slabs:  out = relu( sum_di (R[di] @ in) @ M[di] + b ).
    R handles vertical shift + stride + zero padding; M handles horizontal
    shift + stride + zero padding + depthwise weights + (pointwise * BN scale);
    b carries dw-bias, pw-bias and BN shift.
    """
    dw_w, dw_b = layer["dw_w"], layer["dw_b"]          # (3,3,Ci), (Ci,)
    pw_w, pw_b = layer["pw_w"], layer["pw_b"]          # (Ci,Co),  (Co,)
    Co = pw_w.shape[1]
    scale, shift = _bn_scale_shift(layer["bn"])
    Ho = _conv_out(Hin, 3, stride, 1)
    Wo = _conv_out(Win, 3, stride, 1)

    pw_eff = pw_w * scale[None, :]                                   # (Ci,Co)
    eff_shift = shift + scale * (pw_b + dw_b @ pw_w)                 # (Co,)

    # R[di, ho, h] = 1  iff  h == stride*ho + di - 1  (in range)
    R = np.zeros((3, Ho, Hin), np.float32)
    for di in range(3):
        for ho in range(Ho):
            h = stride * ho + di - 1
            if 0 <= h < Hin:
                R[di, ho, h] = 1.0

    # place[dj, w, wo] = 1  iff  w == stride*wo + dj - 1  (in range)
    place = np.zeros((3, Win, Wo), np.float32)
    for dj in range(3):
        for wo in range(Wo):
            w = stride * wo + dj - 1
            if 0 <= w < Win:
                place[dj, w, wo] = 1.0

    # M[di][w*Ci+c, wo*Co+o] = sum_dj place[dj,w,wo] * dw_w[di,dj,c] * pw_eff[c,o]
    M = jnp.einsum("jpq,ijc,co->ipcqo", jnp.asarray(place), dw_w, pw_eff)
    M = M.reshape(3, Win * Ci, Wo * Co).astype(jnp.float32)
    b = jnp.tile(eff_shift, Wo)[None, :].astype(jnp.float32)         # (1, Wo*Co)
    return jnp.asarray(R), M, b, Ho, Wo


def build_shortcut_mats(sc, stride, Hin, Win, Ci):
    """Fold 1x1-conv(stride, no bias) + BN(eval) shortcut into (M, b).

    The row subsample (Rs) is NOT built: it equals the first rep's R[1] and
    the kernel reuses those rows directly.
    """
    w = sc["w"]                                                      # (Ci, Co)
    Co = w.shape[1]
    scale, shift = _bn_scale_shift(sc["bn"])
    Ho = _conv_out(Hin, 1, stride, 0)
    Wo = _conv_out(Win, 1, stride, 0)
    w_eff = w * scale[None, :]

    place = np.zeros((Win, Wo), np.float32)
    for wo in range(Wo):
        place[stride * wo, wo] = 1.0

    M = jnp.einsum("pq,co->pcqo", jnp.asarray(place), w_eff)
    M = M.reshape(Win * Ci, Wo * Co).astype(jnp.float32)
    b = jnp.tile(shift, Wo)[None, :].astype(jnp.float32)
    return M, b, Ho, Wo


# ------------------------------ forward wrapper -------------------------------

def xception_block_forward(x, params, stride):
    """x: (N, H, W, Cin) NHWC float32  ->  (N, Ho, Wo, Cout)."""
    N, H, W, Cin = x.shape
    reps = len(params["layers"])
    assert reps >= 1
    Cout = params["layers"][0]["pw_w"].shape[1]

    # Fold all weights / biases / BN / padding / stride at trace time.
    mats = []
    strides = []
    Hc, Wc = H, W
    for i, layer in enumerate(params["layers"]):
        s = stride if i == 0 else 1
        strides.append(s)
        Ci = layer["dw_w"].shape[-1]
        R, M, b, Hc, Wc = build_layer_mats(layer, s, Hc, Wc, Ci)
        mats += [R, M, b]
    Ho, Wo = Hc, Wc

    has_shortcut = params["shortcut"] is not None
    if has_shortcut:
        Ms, bs, Hs, Ws = build_shortcut_mats(params["shortcut"], stride,
                                             H, W, Cin)
        assert (Hs, Ws) == (Ho, Wo)
        mats += [Ms, bs]

    # Lane-dense slab views (trailing dim = W*C); pure metadata reshapes.
    x_slab = x.reshape(N, H, W * Cin)

    in_specs = [pl.BlockSpec((1, H, W * Cin), lambda n: (n, 0, 0))]
    for m in mats:
        # Whole-array blocks; constant block index => DMA'd once, kept in VMEM.
        in_specs.append(pl.BlockSpec(m.shape, lambda n, r=m.ndim: (0,) * r))

    out_slab = pl.pallas_call(
        make_fused_kernel(reps, has_shortcut, tuple(strides)),
        out_shape=jax.ShapeDtypeStruct((N, Ho, Wo * Cout), jnp.float32),
        grid=(N,),
        in_specs=in_specs,
        out_specs=pl.BlockSpec((1, Ho, Wo * Cout), lambda n: (n, 0, 0)),
        compiler_params=pltpu.CompilerParams(
            dimension_semantics=("parallel",)),   # batch over TCs on v7x
    )(x_slab, *mats)

    return out_slab.reshape(N, Ho, Wo, Cout)


# --------------------------- deterministic params ----------------------------

def make_params(in_ch, out_ch, reps, stride, key):
    layers = []
    for i in range(reps):
        cin = in_ch if i == 0 else out_ch
        key, k1, k2, k3, k4, k5, k6, k7, k8 = jax.random.split(key, 9)
        layers.append(dict(
            dw_w=0.2 * jax.random.normal(k1, (3, 3, cin), jnp.float32),
            dw_b=0.1 * jax.random.normal(k2, (cin,), jnp.float32),
            pw_w=0.2 * jax.random.normal(k3, (cin, out_ch), jnp.float32),
            pw_b=0.1 * jax.random.normal(k4, (out_ch,), jnp.float32),
            bn=dict(
                gamma=1.0 + 0.1 * jax.random.normal(k5, (out_ch,), jnp.float32),
                beta=0.1 * jax.random.normal(k6, (out_ch,), jnp.float32),
                mean=0.1 * jax.random.normal(k7, (out_ch,), jnp.float32),
                var=jax.random.uniform(k8, (out_ch,), jnp.float32, 0.5, 1.5),
            ),
        ))
    shortcut = None
    if in_ch != out_ch or stride != 1:
        key, k1, k2, k3, k4, k5 = jax.random.split(key, 6)
        shortcut = dict(
            w=0.2 * jax.random.normal(k1, (in_ch, out_ch), jnp.float32),
            bn=dict(
                gamma=1.0 + 0.1 * jax.random.normal(k2, (out_ch,), jnp.float32),
                beta=0.1 * jax.random.normal(k3, (out_ch,), jnp.float32),
                mean=0.1 * jax.random.normal(k4, (out_ch,), jnp.float32),
                var=jax.random.uniform(k5, (out_ch,), jnp.float32, 0.5, 1.5),
            ),
        )
    return dict(layers=layers, shortcut=shortcut)


# ------------------------------ pure-JAX reference ---------------------------

def ref_forward(x, params, stride):
    hp = jax.lax.Precision.HIGHEST

    def bn(v, p):
        return (v - p["mean"]) / jnp.sqrt(p["var"] + EPS) * p["gamma"] + p["beta"]

    out = x
    for i, layer in enumerate(params["layers"]):
        s = stride if i == 0 else 1
        C = layer["dw_w"].shape[-1]
        out = jax.lax.conv_general_dilated(
            out, layer["dw_w"].reshape(3, 3, 1, C),
            window_strides=(s, s), padding=((1, 1), (1, 1)),
            dimension_numbers=("NHWC", "HWIO", "NHWC"),
            feature_group_count=C, precision=hp) + layer["dw_b"]
        out = jnp.einsum("nhwc,co->nhwo", out, layer["pw_w"], precision=hp) + layer["pw_b"]
        out = jnp.maximum(bn(out, layer["bn"]), 0.0)
    if params["shortcut"] is None:
        sc_out = x
    else:
        p = params["shortcut"]
        sc_out = jnp.einsum("nhwc,co->nhwo", x[:, ::stride, ::stride, :],
                            p["w"], precision=hp)
        sc_out = bn(sc_out, p["bn"])
    return out + sc_out


# ----------------------------------- main ------------------------------------

if __name__ == "__main__":
    # XceptionBlock(input_channels=8, output_channels=16, repetitions=2, stride=2)
    # on a PyTorch NCHW input of shape (2, 8, 16, 16)  ->  NHWC (2, 16, 16, 8).
    N, Cin, Cout, H, W = 2, 8, 16, 16, 16
    reps, stride = 2, 2

    key = jax.random.PRNGKey(0)
    key, xk = jax.random.split(key)
    x = jax.random.normal(xk, (N, H, W, Cin), jnp.float32)
    params = make_params(Cin, Cout, reps, stride, key)

    out = jax.block_until_ready(xception_block_forward(x, params, stride))
    ref = ref_forward(x, params, stride)
    np.testing.assert_allclose(np.asarray(out), np.asarray(ref),
                               rtol=1e-2, atol=1e-2)

    # Identity-shortcut configuration (in_ch == out_ch, stride == 1).
    key2 = jax.random.PRNGKey(1)
    key2, xk2 = jax.random.split(key2)
    x2 = jax.random.normal(xk2, (N, H, W, Cout), jnp.float32)
    params2 = make_params(Cout, Cout, 2, 1, key2)
    out2 = jax.block_until_ready(xception_block_forward(x2, params2, 1))
    ref2 = ref_forward(x2, params2, 1)
    np.testing.assert_allclose(np.asarray(out2), np.asarray(ref2),
                               rtol=1e-2, atol=1e-2)

    print("KERNEL_OK")
</pallas_src>

<mosaic_0001>
module attributes {stable_mosaic.version = 11 : i64} {
  func.func @kernel(%arg0: i32, %arg1: memref<1x16x128xf32, #tpu.memory_space<vmem>>, %arg2: memref<3x8x16xf32, #tpu.memory_space<vmem>>, %arg3: memref<3x128x128xf32, #tpu.memory_space<vmem>>, %arg4: memref<1x128xf32, #tpu.memory_space<vmem>>, %arg5: memref<3x8x8xf32, #tpu.memory_space<vmem>>, %arg6: memref<3x128x128xf32, #tpu.memory_space<vmem>>, %arg7: memref<1x128xf32, #tpu.memory_space<vmem>>, %arg8: memref<128x128xf32, #tpu.memory_space<vmem>>, %arg9: memref<1x128xf32, #tpu.memory_space<vmem>>, %arg10: memref<1x8x128xf32, #tpu.memory_space<vmem>>) attributes {dimension_semantics = [#tpu.dimension_semantics<parallel>], iteration_bounds = array<i64: 2>, scalar_prefetch = 0 : i64, scratch_operands = 0 : i64, tpu.core_type = #tpu.core_type<tc>, window_params = [{transform_indices = @transform_0, window_bounds = array<i64: 1, 16, 128>}, {pipeline_mode = #tpu.pipeline_mode<synchronous>, transform_indices = @transform_1, window_bounds = array<i64: 3, 8, 16>}, {pipeline_mode = #tpu.pipeline_mode<synchronous>, transform_indices = @transform_2, window_bounds = array<i64: 3, 128, 128>}, {pipeline_mode = #tpu.pipeline_mode<synchronous>, transform_indices = @transform_3, window_bounds = array<i64: 1, 128>}, {pipeline_mode = #tpu.pipeline_mode<synchronous>, transform_indices = @transform_4, window_bounds = array<i64: 3, 8, 8>}, {pipeline_mode = #tpu.pipeline_mode<synchronous>, transform_indices = @transform_5, window_bounds = array<i64: 3, 128, 128>}, {pipeline_mode = #tpu.pipeline_mode<synchronous>, transform_indices = @transform_6, window_bounds = array<i64: 1, 128>}, {pipeline_mode = #tpu.pipeline_mode<synchronous>, transform_indices = @transform_7, window_bounds = array<i64: 128, 128>}, {pipeline_mode = #tpu.pipeline_mode<synchronous>, transform_indices = @transform_8, window_bounds = array<i64: 1, 128>}, {transform_indices = @transform_9, window_bounds = array<i64: 1, 8, 128>}]} {
    %c0 = arith.constant 0 : index
    %c0_0 = arith.constant 0 : index
    %c0_1 = arith.constant 0 : index
    %0 = vector.load %arg1[%c0, %c0_0, %c0_1] : memref<1x16x128xf32, #tpu.memory_space<vmem>>, vector<1x16x128xf32>
    %1 = vector.shape_cast %0 : vector<1x16x128xf32> to vector<16x128xf32>
    %cst = arith.constant 0.000000e+00 : f32
    %2 = vector.broadcast %cst : f32 to vector<8x128xf32>
    %c0_2 = arith.constant 0 : index
    %c0_3 = arith.constant 0 : index
    %c0_4 = arith.constant 0 : index
    %3 = vector.load %arg2[%c0_2, %c0_3, %c0_4] : memref<3x8x16xf32, #tpu.memory_space<vmem>>, vector<1x8x16xf32>
    %4 = vector.shape_cast %3 : vector<1x8x16xf32> to vector<8x16xf32>
    %cst_5 = arith.constant dense<0.000000e+00> : vector<8x128xf32>
    %5 = tpu.matmul %4, %1, %cst_5 {dimension_numbers = #tpu.dot_dimension_numbers<[1], [0], [0], [1], [0, 0, 1, 1], [], []>} : vector<8x16xf32>, vector<16x128xf32>, vector<8x128xf32> -> vector<8x128xf32>
    %c0_6 = arith.constant 0 : index
    %c0_7 = arith.constant 0 : index
    %c0_8 = arith.constant 0 : index
    %6 = vector.load %arg3[%c0_6, %c0_7, %c0_8] : memref<3x128x128xf32, #tpu.memory_space<vmem>>, vector<1x128x128xf32>
    %7 = vector.shape_cast %6 : vector<1x128x128xf32> to vector<128x128xf32>
    %cst_9 = arith.constant dense<0.000000e+00> : vector<8x128xf32>
    %8 = tpu.matmul %5, %7, %cst_9 {dimension_numbers = #tpu.dot_dimension_numbers<[1], [0], [0], [1], [0, 0, 1, 1], [], []>} : vector<8x128xf32>, vector<128x128xf32>, vector<8x128xf32> -> vector<8x128xf32>
    %9 = arith.addf %2, %8 : vector<8x128xf32>
    %c1 = arith.constant 1 : index
    %c0_10 = arith.constant 0 : index
    %c0_11 = arith.constant 0 : index
    %10 = vector.load %arg2[%c1, %c0_10, %c0_11] : memref<3x8x16xf32, #tpu.memory_space<vmem>>, vector<1x8x16xf32>
    %11 = vector.shape_cast %10 : vector<1x8x16xf32> to vector<8x16xf32>
    %cst_12 = arith.constant dense<0.000000e+00> : vector<8x128xf32>
    %12 = tpu.matmul %11, %1, %cst_12 {dimension_numbers = #tpu.dot_dimension_numbers<[1], [0], [0], [1], [0, 0, 1, 1], [], []>} : vector<8x16xf32>, vector<16x128xf32>, vector<8x128xf32> -> vector<8x128xf32>
    %c1_13 = arith.constant 1 : index
    %c0_14 = arith.constant 0 : index
    %c0_15 = arith.constant 0 : index
    %13 = vector.load %arg3[%c1_13, %c0_14, %c0_15] : memref<3x128x128xf32, #tpu.memory_space<vmem>>, vector<1x128x128xf32>
    %14 = vector.shape_cast %13 : vector<1x128x128xf32> to vector<128x128xf32>
    %cst_16 = arith.constant dense<0.000000e+00> : vector<8x128xf32>
    %15 = tpu.matmul %12, %14, %cst_16 {dimension_numbers = #tpu.dot_dimension_numbers<[1], [0], [0], [1], [0, 0, 1, 1], [], []>} : vector<8x128xf32>, vector<128x128xf32>, vector<8x128xf32> -> vector<8x128xf32>
    %16 = arith.addf %9, %15 : vector<8x128xf32>
    %c2 = arith.constant 2 : index
    %c0_17 = arith.constant 0 : index
    %c0_18 = arith.constant 0 : index
    %17 = vector.load %arg2[%c2, %c0_17, %c0_18] : memref<3x8x16xf32, #tpu.memory_space<vmem>>, vector<1x8x16xf32>
    %18 = vector.shape_cast %17 : vector<1x8x16xf32> to vector<8x16xf32>
    %cst_19 = arith.constant dense<0.000000e+00> : vector<8x128xf32>
    %19 = tpu.matmul %18, %1, %cst_19 {dimension_numbers = #tpu.dot_dimension_numbers<[1], [0], [0], [1], [0, 0, 1, 1], [], []>} : vector<8x16xf32>, vector<16x128xf32>, vector<8x128xf32> -> vector<8x128xf32>
    %c2_20 = arith.constant 2 : index
    %c0_21 = arith.constant 0 : index
    %c0_22 = arith.constant 0 : index
    %20 = vector.load %arg3[%c2_20, %c0_21, %c0_22] : memref<3x128x128xf32, #tpu.memory_space<vmem>>, vector<1x128x128xf32>
    %21 = vector.shape_cast %20 : vector<1x128x128xf32> to vector<128x128xf32>
    %cst_23 = arith.constant dense<0.000000e+00> : vector<8x128xf32>
    %22 = tpu.matmul %19, %21, %cst_23 {dimension_numbers = #tpu.dot_dimension_numbers<[1], [0], [0], [1], [0, 0, 1, 1], [], []>} : vector<8x128xf32>, vector<128x128xf32>, vector<8x128xf32> -> vector<8x128xf32>
    %23 = arith.addf %16, %22 : vector<8x128xf32>
    %c0_24 = arith.constant 0 : index
    %c0_25 = arith.constant 0 : index
    %24 = vector.load %arg4[%c0_24, %c0_25] : memref<1x128xf32, #tpu.memory_space<vmem>>, vector<1x128xf32>
    %25 = vector.broadcast %24 : vector<1x128xf32> to vector<8x128xf32>
    %26 = arith.addf %23, %25 : vector<8x128xf32>
    %cst_26 = arith.constant 0.000000e+00 : f32
    %27 = vector.broadcast %cst_26 : f32 to vector<8x128xf32>
    %28 = arith.maximumf %26, %27 : vector<8x128xf32>
    %cst_27 = arith.constant 0.000000e+00 : f32
    %29 = vector.broadcast %cst_27 : f32 to vector<8x128xf32>
    %c0_28 = arith.constant 0 : index
    %c0_29 = arith.constant 0 : index
    %c0_30 = arith.constant 0 : index
    %30 = vector.load %arg5[%c0_28, %c0_29, %c0_30] : memref<3x8x8xf32, #tpu.memory_space<vmem>>, vector<1x8x8xf32>
    %31 = vector.shape_cast %30 : vector<1x8x8xf32> to vector<8x8xf32>
    %cst_31 = arith.constant dense<0.000000e+00> : vector<8x128xf32>
    %32 = tpu.matmul %31, %28, %cst_31 {dimension_numbers = #tpu.dot_dimension_numbers<[1], [0], [0], [1], [0, 0, 1, 1], [], []>} : vector<8x8xf32>, vector<8x128xf32>, vector<8x128xf32> -> vector<8x128xf32>
    %c0_32 = arith.constant 0 : index
    %c0_33 = arith.constant 0 : index
    %c0_34 = arith.constant 0 : index
    %33 = vector.load %arg6[%c0_32, %c0_33, %c0_34] : memref<3x128x128xf32, #tpu.memory_space<vmem>>, vector<1x128x128xf32>
    %34 = vector.shape_cast %33 : vector<1x128x128xf32> to vector<128x128xf32>
    %cst_35 = arith.constant dense<0.000000e+00> : vector<8x128xf32>
    %35 = tpu.matmul %32, %34, %cst_35 {dimension_numbers = #tpu.dot_dimension_numbers<[1], [0], [0], [1], [0, 0, 1, 1], [], []>} : vector<8x128xf32>, vector<128x128xf32>, vector<8x128xf32> -> vector<8x128xf32>
    %36 = arith.addf %29, %35 : vector<8x128xf32>
    %c1_36 = arith.constant 1 : index
    %c0_37 = arith.constant 0 : index
    %c0_38 = arith.constant 0 : index
    %37 = vector.load %arg6[%c1_36, %c0_37, %c0_38] : memref<3x128x128xf32, #tpu.memory_space<vmem>>, vector<1x128x128xf32>
    %38 = vector.shape_cast %37 : vector<1x128x128xf32> to vector<128x128xf32>
    %cst_39 = arith.constant dense<0.000000e+00> : vector<8x128xf32>
    %39 = tpu.matmul %28, %38, %cst_39 {dimension_numbers = #tpu.dot_dimension_numbers<[1], [0], [0], [1], [0, 0, 1, 1], [], []>} : vector<8x128xf32>, vector<128x128xf32>, vector<8x128xf32> -> vector<8x128xf32>
    %40 = arith.addf %36, %39 : vector<8x128xf32>
    %c2_40 = arith.constant 2 : index
    %c0_41 = arith.constant 0 : index
    %c0_42 = arith.constant 0 : index
    %41 = vector.load %arg5[%c2_40, %c0_41, %c0_42] : memref<3x8x8xf32, #tpu.memory_space<vmem>>, vector<1x8x8xf32>
    %42 = vector.shape_cast %41 : vector<1x8x8xf32> to vector<8x8xf32>
    %cst_43 = arith.constant dense<0.000000e+00> : vector<8x128xf32>
    %43 = tpu.matmul %42, %28, %cst_43 {dimension_numbers = #tpu.dot_dimension_numbers<[1], [0], [0], [1], [0, 0, 1, 1], [], []>} : vector<8x8xf32>, vector<8x128xf32>, vector<8x128xf32> -> vector<8x128xf32>
    %c2_44 = arith.constant 2 : index
    %c0_45 = arith.constant 0 : index
    %c0_46 = arith.constant 0 : index
    %44 = vector.load %arg6[%c2_44, %c0_45, %c0_46] : memref<3x128x128xf32, #tpu.memory_space<vmem>>, vector<1x128x128xf32>
    %45 = vector.shape_cast %44 : vector<1x128x128xf32> to vector<128x128xf32>
    %cst_47 = arith.constant dense<0.000000e+00> : vector<8x128xf32>
    %46 = tpu.matmul %43, %45, %cst_47 {dimension_numbers = #tpu.dot_dimension_numbers<[1], [0], [0], [1], [0, 0, 1, 1], [], []>} : vector<8x128xf32>, vector<128x128xf32>, vector<8x128xf32> -> vector<8x128xf32>
    %47 = arith.addf %40, %46 : vector<8x128xf32>
    %c0_48 = arith.constant 0 : index
    %c0_49 = arith.constant 0 : index
    %48 = vector.load %arg7[%c0_48, %c0_49] : memref<1x128xf32, #tpu.memory_space<vmem>>, vector<1x128xf32>
    %49 = vector.broadcast %48 : vector<1x128xf32> to vector<8x128xf32>
    %50 = arith.addf %47, %49 : vector<8x128xf32>
    %cst_50 = arith.constant 0.000000e+00 : f32
    %51 = vector.broadcast %cst_50 : f32 to vector<8x128xf32>
    %52 = arith.maximumf %50, %51 : vector<8x128xf32>
    %c0_51 = arith.constant 0 : index
    %c0_52 = arith.constant 0 : index
    %53 = vector.load %arg8[%c0_51, %c0_52] : memref<128x128xf32, #tpu.memory_space<vmem>>, vector<128x128xf32>
    %cst_53 = arith.constant dense<0.000000e+00> : vector<8x128xf32>
    %54 = tpu.matmul %12, %53, %cst_53 {dimension_numbers = #tpu.dot_dimension_numbers<[1], [0], [0], [1], [0, 0, 1, 1], [], []>} : vector<8x128xf32>, vector<128x128xf32>, vector<8x128xf32> -> vector<8x128xf32>
    %c0_54 = arith.constant 0 : index
    %c0_55 = arith.constant 0 : index
    %55 = vector.load %arg9[%c0_54, %c0_55] : memref<1x128xf32, #tpu.memory_space<vmem>>, vector<1x128xf32>
    %56 = vector.broadcast %55 : vector<1x128xf32> to vector<8x128xf32>
    %57 = arith.addf %54, %56 : vector<8x128xf32>
    %58 = arith.addf %52, %57 : vector<8x128xf32>
    %c0_56 = arith.constant 0 : index
    %c0_57 = arith.constant 0 : index
    %c0_58 = arith.constant 0 : index
    %59 = vector.load %arg10[%c0_56, %c0_57, %c0_58] : memref<1x8x128xf32, #tpu.memory_space<vmem>>, vector<1x8x128xf32>
    %60 = vector.shape_cast %59 : vector<1x8x128xf32> to vector<8x128xf32>
    %61 = vector.shape_cast %58 : vector<8x128xf32> to vector<1x8x128xf32>
    tpu.vector_store %arg10[%c0_56, %c0_57, %c0_58], %61 {strides = array<i32>} : memref<1x8x128xf32, #tpu.memory_space<vmem>>, vector<1x8x128xf32>,
    return
  }
  func.func @transform_0(%arg0: i32) -> (i32, i32, i32) {
    %c0_i32 = arith.constant 0 : i32
    %c0_i32_0 = arith.constant 0 : i32
    %c0_i32_1 = arith.constant 0 : i32
    return %arg0, %c0_i32, %c0_i32_0 : i32, i32, i32
  }
  func.func @transform_1(%arg0: i32) -> (i32, i32, i32) {
    %c0_i32 = arith.constant 0 : i32
    %c0_i32_0 = arith.constant 0 : i32
    %c0_i32_1 = arith.constant 0 : i32
    %c0_i32_2 = arith.constant 0 : i32
    return %c0_i32, %c0_i32_0, %c0_i32_1 : i32, i32, i32
  }
  func.func @transform_2(%arg0: i32) -> (i32, i32, i32) {
    %c0_i32 = arith.constant 0 : i32
    %c0_i32_0 = arith.constant 0 : i32
    %c0_i32_1 = arith.constant 0 : i32
    %c0_i32_2 = arith.constant 0 : i32
    return %c0_i32, %c0_i32_0, %c0_i32_1 : i32, i32, i32
  }
  func.func @transform_3(%arg0: i32) -> (i32, i32) {
    %c0_i32 = arith.constant 0 : i32
    %c0_i32_0 = arith.constant 0 : i32
    %c0_i32_1 = arith.constant 0 : i32
    return %c0_i32, %c0_i32_0 : i32, i32
  }
  func.func @transform_4(%arg0: i32) -> (i32, i32, i32) {
    %c0_i32 = arith.constant 0 : i32
    %c0_i32_0 = arith.constant 0 : i32
    %c0_i32_1 = arith.constant 0 : i32
    %c0_i32_2 = arith.constant 0 : i32
    return %c0_i32, %c0_i32_0, %c0_i32_1 : i32, i32, i32
  }
  func.func @transform_5(%arg0: i32) -> (i32, i32, i32) {
    %c0_i32 = arith.constant 0 : i32
    %c0_i32_0 = arith.constant 0 : i32
    %c0_i32_1 = arith.constant 0 : i32
    %c0_i32_2 = arith.constant 0 : i32
    return %c0_i32, %c0_i32_0, %c0_i32_1 : i32, i32, i32
  }
  func.func @transform_6(%arg0: i32) -> (i32, i32) {
    %c0_i32 = arith.constant 0 : i32
    %c0_i32_0 = arith.constant 0 : i32
    %c0_i32_1 = arith.constant 0 : i32
    return %c0_i32, %c0_i32_0 : i32, i32
  }
  func.func @transform_7(%arg0: i32) -> (i32, i32) {
    %c0_i32 = arith.constant 0 : i32
    %c0_i32_0 = arith.constant 0 : i32
    %c0_i32_1 = arith.constant 0 : i32
    return %c0_i32, %c0_i32_0 : i32, i32
  }
  func.func @transform_8(%arg0: i32) -> (i32, i32) {
    %c0_i32 = arith.constant 0 : i32
    %c0_i32_0 = arith.constant 0 : i32
    %c0_i32_1 = arith.constant 0 : i32
    return %c0_i32, %c0_i32_0 : i32, i32
  }
  func.func @transform_9(%arg0: i32) -> (i32, i32, i32) {
    %c0_i32 = arith.constant 0 : i32
    %c0_i32_0 = arith.constant 0 : i32
    %c0_i32_1 = arith.constant 0 : i32
    return %arg0, %c0_i32, %c0_i32_0 : i32, i32, i32
  }
}

</mosaic_0001>

<llo_original>
// kernel: tpu_custom_call.1
$region0: #{tpu_custom_call.1}
  #allocation0 [shape = 'u32[]', space=smem, size = 0x4, offset = 0x4, fixed_abs, tag = 'smem constant byte address 0x4 - core index']
  #allocation1 [shape = 'u32[144,128]{1,0:T(1,128)}', space=vmem, size = 0x12000, scoped, tag = 'internal scratch']
  %s0 = inlined_call_operand.hbm [shape: f32[2,16,128], index: 0, kind: input, shape index: {}]
  %s1 = inlined_call_operand.hbm [shape: f32[3,8,16], index: 1, kind: input, shape index: {}]
  %s2 = inlined_call_operand.hbm [shape: f32[3,128,128], index: 2, kind: input, shape index: {}]
  %s3 = inlined_call_operand.vmem [shape: f32[1,128], index: 3, kind: input, shape index: {}]
  %s4 = inlined_call_operand.hbm [shape: f32[3,8,8], index: 4, kind: input, shape index: {}]
  %s5 = inlined_call_operand.hbm [shape: f32[3,128,128], index: 5, kind: input, shape index: {}]
  %s6 = inlined_call_operand.vmem [shape: f32[1,128], index: 6, kind: input, shape index: {}]
  %s7 = inlined_call_operand.hbm [shape: f32[128,128], index: 7, kind: input, shape index: {}]
  %s8 = inlined_call_operand.vmem [shape: f32[1,128], index: 8, kind: input, shape index: {}]
  %s9 = inlined_call_operand.hbm [shape: f32[2,8,128], index: 9, kind: output, shape index: {}]
  %s10 = sld [smem:[#allocation0]]
  $region93: #{tpu_custom_call.1} parent=0
    _
  %s12 = ssub.s32 1, %s10
  %s13 = scalar_select 0, %s12, %s10
  $region1: #{tpu_custom_call.1} parent=0
    #allocation2 [shape = 'u8[16384]{0}', space=vmem, size = 0x4000, scoped, tag = 'input window, operand 0']
    #allocation3 [shape = 's32[2]{0}', space=sflag, size = 0x8, scoped, tag = 'scoped memory for tpu_custom_call.1']
    #allocation4 [shape = 's32[2]{0}', space=sflag, size = 0x8, scoped, tag = 'scoped memory for tpu_custom_call.1']
    #allocation5 [shape = 'u8[12288]{0}', space=vmem, size = 0x3000, scoped, tag = 'input window, operand 1, single buffered']
    #allocation6 [shape = 's32[1]{0}', space=sflag, size = 0x4, scoped, tag = 'scoped memory for tpu_custom_call.1']
    #allocation7 [shape = 'u8[196608]{0}', space=vmem, size = 0x30000, scoped, tag = 'input window, operand 2, single buffered']
    #allocation8 [shape = 'u8[12288]{0}', space=vmem, size = 0x3000, scoped, tag = 'input window, operand 4, single buffered']
    #allocation9 [shape = 's32[1]{0}', space=sflag, size = 0x4, scoped, tag = 'scoped memory for tpu_custom_call.1']
    #allocation10 [shape = 'u8[196608]{0}', space=vmem, size = 0x30000, scoped, tag = 'input window, operand 5, single buffered']
    #allocation11 [shape = 'u8[65536]{0}', space=vmem, size = 0x10000, scoped, tag = 'input window, operand 7, single buffered']
    #allocation12 [shape = 's32[1]{0}', space=sflag, size = 0x4, scoped, tag = 'scoped memory for tpu_custom_call.1']
    #allocation13 [shape = 'u8[8192]{0}', space=vmem, size = 0x2000, scoped, tag = 'output window, operand 0']
    %14 = vsyncpa [#allocation3], 0
    %s15 = scalar_lea.sflag [#allocation3], 1
    %16 = vsyncpa %s15, 0
    %17 = vsyncpa [#allocation6], 0
    %18 = vsyncpa [#allocation9], 0
    %19 = vsyncpa [#allocation12], 0
    %20 = vsyncpa [#allocation4], 0
    %s21 = scalar_lea.sflag [#allocation4], 1
    %22 = vsyncpa %s21, 0
    loop: start=0, step=1, limit=4
    $region2: #{tpu_custom_call.1} parent=1 // loop_pre_header
      _
    $region3: #{tpu_custom_call.1} parent=1 // loop_header
      %s24 = sphi 0, %s28
      %p25 = scmp.ge.s32.totalorder %s24, 4
      %s34 = sphi 0, %s36
      %s37 = sphi 0, %s34
      %s38 = sphi 0, %s37
      %s54 = sphi 0, %s38
      %s58 = sphi 0, %s58
      %s60 = sphi 0, %s58
      %s61 = sphi 0, %s60
      %s75 = sphi 0, %s61
      %s79 = sphi 0, %s79
      %s81 = sphi 0, %s79
      %s82 = sphi 0, %s81
      %s96 = sphi 0, %s82
      %s100 = sphi 0, %s100
      %s102 = sphi 0, %s100
      %s103 = sphi 0, %s102
      %s117 = sphi 0, %s103
      %s121 = sphi 0, %s121
      %s123 = sphi 0, %s121
      %s124 = sphi 0, %s123
      %s138 = sphi 0, %s124
      %s142 = sphi 0, %s142
      %s144 = sphi 0, %s142
      %s145 = sphi 0, %s144
      %s159 = sphi 0, %s145
      %s163 = sphi 0, %s163
      %s165 = sphi 0, %s163
      %s166 = sphi 0, %s165
      %s180 = sphi 0, %s166
      %s184 = sphi 0, %s184
      %s186 = sphi 0, %s184
      %s187 = sphi 0, %s186
      %s201 = sphi 0, %s187
      %s205 = sphi 0, %s205
      %s207 = sphi 0, %s205
      %s208 = sphi 0, %s207
      %s222 = sphi 0, %s208
      %s228 = sphi 0, %s230
      %s231 = sphi 0, %s228
      %s232 = sphi 0, %s231
      %s248 = sphi 0, %s232
    $region4: #{tpu_custom_call.1} parent=1 // loop_header_branch
      %27 = sbr.rel (%p25) target = $region8
    $region5: #{tpu_custom_call.1} parent=1 // loop_body
      %s29 = ssub.s32 %s24, 1
      %s30 = ssub.s32 %s24, 2
      %s31 = sadd.s32 %s24, 1
      %s32 = ssub.s32 %s24, %s31
      %p33 = scmp.eq.s32.totalorder %s32, 0
      %s35 = sadd.s32 %s34, 1
      %s36 = scalar_select %p33, %s34, %s35
      %p39 = pneg %p33
      %p40 = scmp.eq.s32.totalorder %s24, 1
      %p41 = por %p39, %p40
      %p42 = scmp.ne.s32.totalorder %s34, %s37
      %p43 = scmp.eq.s32.totalorder %s24, 0
      %p44 = por %p42, %p43
      %p45 = scmp.ne.s32.totalorder %s34, %s37
      %p46 = scmp.eq.s32.totalorder %s29, 1
      %p47 = por %p45, %p46
      %p48 = scmp.ne.s32.totalorder %s37, %s38
      %p49 = scmp.eq.s32.totalorder %s29, 0
      %p50 = por %p48, %p49
      %p51 = scmp.ne.s32.totalorder %s37, %s38
      %p52 = scmp.eq.s32.totalorder %s30, 1
      %p53 = por %p51, %p52
      %p55 = scmp.ne.s32.totalorder %s38, %s54
      %p56 = scmp.eq.s32.totalorder %s30, 0
      %p57 = por %p55, %p56
      %s59 = sadd.s32 %s58, 1
      %p62 = scmp.eq.s32.totalorder %s24, 1
      %p63 = scmp.ne.s32.totalorder %s58, %s60
      %p64 = scmp.eq.s32.totalorder %s24, 0
      %p65 = por %p63, %p64
      %p66 = scmp.ne.s32.totalorder %s58, %s60
      %p67 = scmp.eq.s32.totalorder %s29, 1
      %p68 = por %p66, %p67
      %p69 = scmp.ne.s32.totalorder %s60, %s61
      %p70 = scmp.eq.s32.totalorder %s29, 0
      %p71 = por %p69, %p70
      %p72 = scmp.ne.s32.totalorder %s60, %s61
      %p73 = scmp.eq.s32.totalorder %s30, 1
      %p74 = por %p72, %p73
      %p76 = scmp.ne.s32.totalorder %s61, %s75
      %p77 = scmp.eq.s32.totalorder %s30, 0
      %p78 = por %p76, %p77
      %s80 = sadd.s32 %s79, 1
      %p83 = scmp.eq.s32.totalorder %s24, 1
      %p84 = scmp.ne.s32.totalorder %s79, %s81
      %p85 = scmp.eq.s32.totalorder %s24, 0
      %p86 = por %p84, %p85
      %p87 = scmp.ne.s32.totalorder %s79, %s81
      %p88 = scmp.eq.s32.totalorder %s29, 1
      %p89 = por %p87, %p88
      %p90 = scmp.ne.s32.totalorder %s81, %s82
      %p91 = scmp.eq.s32.totalorder %s29, 0
      %p92 = por %p90, %p91
      %p93 = scmp.ne.s32.totalorder %s81, %s82
      %p94 = scmp.eq.s32.totalorder %s30, 1
      %p95 = por %p93, %p94
      %p97 = scmp.ne.s32.totalorder %s82, %s96
      %p98 = scmp.eq.s32.totalorder %s30, 0
      %p99 = por %p97, %p98
      %s101 = sadd.s32 %s100, 1
      %p104 = scmp.eq.s32.totalorder %s24, 1
      %p105 = scmp.ne.s32.totalorder %s100, %s102
      %p106 = scmp.eq.s32.totalorder %s24, 0
      %p107 = por %p105, %p106
      %p108 = scmp.ne.s32.totalorder %s100, %s102
      %p109 = scmp.eq.s32.totalorder %s29, 1
      %p110 = por %p108, %p109
      %p111 = scmp.ne.s32.totalorder %s102, %s103
      %p112 = scmp.eq.s32.totalorder %s29, 0
      %p113 = por %p111, %p112
      %p114 = scmp.ne.s32.totalorder %s102, %s103
      %p115 = scmp.eq.s32.totalorder %s30, 1
      %p116 = por %p114, %p115
      %p118 = scmp.ne.s32.totalorder %s103, %s117
      %p119 = scmp.eq.s32.totalorder %s30, 0
      %p120 = por %p118, %p119
      %s122 = sadd.s32 %s121, 1
      %p125 = scmp.eq.s32.totalorder %s24, 1
      %p126 = scmp.ne.s32.totalorder %s121, %s123
      %p127 = scmp.eq.s32.totalorder %s24, 0
      %p128 = por %p126, %p127
      %p129 = scmp.ne.s32.totalorder %s121, %s123
      %p130 = scmp.eq.s32.totalorder %s29, 1
      %p131 = por %p129, %p130
      %p132 = scmp.ne.s32.totalorder %s123, %s124
      %p133 = scmp.eq.s32.totalorder %s29, 0
      %p134 = por %p132, %p133
      %p135 = scmp.ne.s32.totalorder %s123, %s124
      %p136 = scmp.eq.s32.totalorder %s30, 1
      %p137 = por %p135, %p136
      %p139 = scmp.ne.s32.totalorder %s124, %s138
      %p140 = scmp.eq.s32.totalorder %s30, 0
      %p141 = por %p139, %p140
      %s143 = sadd.s32 %s142, 1
      %p146 = scmp.eq.s32.totalorder %s24, 1
      %p147 = scmp.ne.s32.totalorder %s142, %s144
      %p148 = scmp.eq.s32.totalorder %s24, 0
      %p149 = por %p147, %p148
      %p150 = scmp.ne.s32.totalorder %s142, %s144
      %p151 = scmp.eq.s32.totalorder %s29, 1
      %p152 = por %p150, %p151
      %p153 = scmp.ne.s32.totalorder %s144, %s145
      %p154 = scmp.eq.s32.totalorder %s29, 0
      %p155 = por %p153, %p154
      %p156 = scmp.ne.s32.totalorder %s144, %s145
      %p157 = scmp.eq.s32.totalorder %s30, 1
      %p158 = por %p156, %p157
      %p160 = scmp.ne.s32.totalorder %s145, %s159
      %p161 = scmp.eq.s32.totalorder %s30, 0
      %p162 = por %p160, %p161
      %s164 = sadd.s32 %s163, 1
      %p167 = scmp.eq.s32.totalorder %s24, 1
      %p168 = scmp.ne.s32.totalorder %s163, %s165
      %p169 = scmp.eq.s32.totalorder %s24, 0
      %p170 = por %p168, %p169
      %p171 = scmp.ne.s32.totalorder %s163, %s165
      %p172 = scmp.eq.s32.totalorder %s29, 1
      %p173 = por %p171, %p172
      %p174 = scmp.ne.s32.totalorder %s165, %s166
      %p175 = scmp.eq.s32.totalorder %s29, 0
      %p176 = por %p174, %p175
      %p177 = scmp.ne.s32.totalorder %s165, %s166
      %p178 = scmp.eq.s32.totalorder %s30, 1
      %p179 = por %p177, %p178
      %p181 = scmp.ne.s32.totalorder %s166, %s180
      %p182 = scmp.eq.s32.totalorder %s30, 0
      %p183 = por %p181, %p182
      %s185 = sadd.s32 %s184, 1
      %p188 = scmp.eq.s32.totalorder %s24, 1
      %p189 = scmp.ne.s32.totalorder %s184, %s186
      %p190 = scmp.eq.s32.totalorder %s24, 0
      %p191 = por %p189, %p190
      %p192 = scmp.ne.s32.totalorder %s184, %s186
      %p193 = scmp.eq.s32.totalorder %s29, 1
      %p194 = por %p192, %p193
      %p195 = scmp.ne.s32.totalorder %s186, %s187
      %p196 = scmp.eq.s32.totalorder %s29, 0
      %p197 = por %p195, %p196
      %p198 = scmp.ne.s32.totalorder %s186, %s187
      %p199 = scmp.eq.s32.totalorder %s30, 1
      %p200 = por %p198, %p199
      %p202 = scmp.ne.s32.totalorder %s187, %s201
      %p203 = scmp.eq.s32.totalorder %s30, 0
      %p204 = por %p202, %p203
      %s206 = sadd.s32 %s205, 1
      %p209 = scmp.eq.s32.totalorder %s24, 1
      %p210 = scmp.ne.s32.totalorder %s205, %s207
      %p211 = scmp.eq.s32.totalorder %s24, 0
      %p212 = por %p210, %p211
      %p213 = scmp.ne.s32.totalorder %s205, %s207
      %p214 = scmp.eq.s32.totalorder %s29, 1
      %p215 = por %p213, %p214
      %p216 = scmp.ne.s32.totalorder %s207, %s208
      %p217 = scmp.eq.s32.totalorder %s29, 0
      %p218 = por %p216, %p217
      %p219 = scmp.ne.s32.totalorder %s207, %s208
      %p220 = scmp.eq.s32.totalorder %s30, 1
      %p221 = por %p219, %p220
      %p223 = scmp.ne.s32.totalorder %s208, %s222
      %p224 = scmp.eq.s32.totalorder %s30, 0
      %p225 = por %p223, %p224
      %s226 = ssub.s32 %s24, %s31
      %p227 = scmp.eq.s32.totalorder %s226, 0
      %s229 = sadd.s32 %s228, 1
      %s230 = scalar_select %p227, %s228, %s229
      %p233 = pneg %p227
      %p234 = scmp.eq.s32.totalorder %s24, 1
      %p235 = por %p233, %p234
      %p236 = scmp.ne.s32.totalorder %s228, %s231
      %p237 = scmp.eq.s32.totalorder %s24, 0
      %p238 = por %p236, %p237
      %p239 = scmp.ne.s32.totalorder %s228, %s231
      %p240 = scmp.eq.s32.totalorder %s29, 1
      %p241 = por %p239, %p240
      %p242 = scmp.ne.s32.totalorder %s231, %s232
      %p243 = scmp.eq.s32.totalorder %s29, 0
      %p244 = por %p242, %p243
      %p245 = scmp.ne.s32.totalorder %s231, %s232
      %p246 = scmp.eq.s32.totalorder %s30, 1
      %p247 = por %p245, %p246
      %p249 = scmp.ne.s32.totalorder %s232, %s248
      %p250 = scmp.eq.s32.totalorder %s30, 0
      %p251 = por %p249, %p250
      %p252 = scmp.le.s32.totalorder 1, %s24
      %p253 = scmp.lt.s32.totalorder %s24, 3
      %p254 = pnand %p252, %p253
      %p255 = pneg %p254
      // Predicated region
      $region9: #{tpu_custom_call.1} parent=5 // pred_check
        _
      $region10: #{tpu_custom_call.1} parent=5 // pred_check_branch
        %257 = sbr.rel (%p254) target = $region12
      $region11: #{tpu_custom_call.1} parent=5 // pred_region
        %s258 = ssub.s32 %s24, 1
        // Predicated region
        $region13: #{tpu_custom_call.1} parent=11 // pred_check
          %p259 = pneg %p71
        $region14: #{tpu_custom_call.1} parent=11 // pred_check_branch
          %261 = sbr.rel (%p259) target = $region16
        $region15: #{tpu_custom_call.1} parent=11 // pred_region
          %s263 = ssub.s32 384, 384
          %264 = vsyncadd [#allocation6], %s263
          %s265 = sshll.u32 [#allocation5], 4
          %s266 = int_to_ptr.vmem [resolvable:$true] %s265
          %271 = dma.hbm_to_vmem [thread:$0]  %s1, 384, %s266, [#allocation6], 128, 128, 8
        $region16: #{tpu_custom_call.1} parent=11 // pred_fallthru
          _
        // Predicated region
        $region17: #{tpu_custom_call.1} parent=11 // pred_check
          %p272 = pneg %p92
        $region18: #{tpu_custom_call.1} parent=11 // pred_check_branch
          %274 = sbr.rel (%p272) target = $region20
        $region19: #{tpu_custom_call.1} parent=11 // pred_region
          %s276 = ssub.s32 6144, 6144
          %277 = vsyncadd [#allocation6], %s276
          %s278 = sshll.u32 [#allocation7], 4
          %s279 = int_to_ptr.vmem [resolvable:$true] %s278
          %284 = dma.hbm_to_vmem [thread:$0]  %s2, 6144, %s279, [#allocation6], 128, 128, 8
        $region20: #{tpu_custom_call.1} parent=11 // pred_fallthru
          _
        // Predicated region
        $region21: #{tpu_custom_call.1} parent=11 // pred_check
          %p285 = pneg %p113
        $region22: #{tpu_custom_call.1} parent=11 // pred_check_branch
          %287 = sbr.rel (%p285) target = $region24
        $region23: #{tpu_custom_call.1} parent=11 // pred_region
          _
        $region24: #{tpu_custom_call.1} parent=11 // pred_fallthru
          _
        // Predicated region
        $region25: #{tpu_custom_call.1} parent=11 // pred_check
          %p288 = pneg %p134
        $region26: #{tpu_custom_call.1} parent=11 // pred_check_branch
          %290 = sbr.rel (%p288) target = $region28
        $region27: #{tpu_custom_call.1} parent=11 // pred_region
          %s292 = ssub.s32 384, 384
          %293 = vsyncadd [#allocation9], %s292
          %s294 = sshll.u32 [#allocation8], 4
          %s295 = int_to_ptr.vmem [resolvable:$true] %s294
          %300 = dma.hbm_to_vmem [thread:$0]  %s4, 384, %s295, [#allocation9], 128, 128, 8
        $region28: #{tpu_custom_call.1} parent=11 // pred_fallthru
          _
        // Predicated region
        $region29: #{tpu_custom_call.1} parent=11 // pred_check
          %p301 = pneg %p155
        $region30: #{tpu_custom_call.1} parent=11 // pred_check_branch
          %303 = sbr.rel (%p301) target = $region32
        $region31: #{tpu_custom_call.1} parent=11 // pred_region
          %s305 = ssub.s32 6144, 6144
          %306 = vsyncadd [#allocation9], %s305
          %s307 = sshll.u32 [#allocation10], 4
          %s308 = int_to_ptr.vmem [resolvable:$true] %s307
          %313 = dma.hbm_to_vmem [thread:$0]  %s5, 6144, %s308, [#allocation9], 128, 128, 8
        $region32: #{tpu_custom_call.1} parent=11 // pred_fallthru
          _
        // Predicated region
        $region33: #{tpu_custom_call.1} parent=11 // pred_check
          %p314 = pneg %p176
        $region34: #{tpu_custom_call.1} parent=11 // pred_check_branch
          %316 = sbr.rel (%p314) target = $region36
        $region35: #{tpu_custom_call.1} parent=11 // pred_region
          _
        $region36: #{tpu_custom_call.1} parent=11 // pred_fallthru
          _
        // Predicated region
        $region37: #{tpu_custom_call.1} parent=11 // pred_check
          %p317 = pneg %p197
        $region38: #{tpu_custom_call.1} parent=11 // pred_check_branch
          %319 = sbr.rel (%p317) target = $region40
        $region39: #{tpu_custom_call.1} parent=11 // pred_region
          %s321 = ssub.s32 2048, 2048
          %322 = vsyncadd [#allocation12], %s321
          %s323 = sshll.u32 [#allocation11], 4
          %s324 = int_to_ptr.vmem [resolvable:$true] %s323
          %329 = dma.hbm_to_vmem [thread:$0]  %s7, 2048, %s324, [#allocation12], 128, 128, 8
        $region40: #{tpu_custom_call.1} parent=11 // pred_fallthru
          _
        // Predicated region
        $region41: #{tpu_custom_call.1} parent=11 // pred_check
          %p330 = pneg %p218
        $region42: #{tpu_custom_call.1} parent=11 // pred_check_branch
          %332 = sbr.rel (%p330) target = $region44
        $region43: #{tpu_custom_call.1} parent=11 // pred_region
          _
        $region44: #{tpu_custom_call.1} parent=11 // pred_fallthru
          _
      $region12: #{tpu_custom_call.1} parent=5 // pred_fallthru
        _
      %p333 = scmp.lt.s32.totalorder %s24, 2
      // Predicated region
      $region45: #{tpu_custom_call.1} parent=5 // pred_check
        %p334 = pneg %p333
      $region46: #{tpu_custom_call.1} parent=5 // pred_check_branch
        %336 = sbr.rel (%p334) target = $region48
      $region47: #{tpu_custom_call.1} parent=5 // pred_region
        // Predicated region
        $region49: #{tpu_custom_call.1} parent=47 // pred_check
          %p337 = pneg %p44
        $region50: #{tpu_custom_call.1} parent=47 // pred_check_branch
          %339 = sbr.rel (%p337) target = $region52
        $region51: #{tpu_custom_call.1} parent=47 // pred_region
          %s340 = sand.u32 %s34, 1
          %s341 = scalar_lea.sflag [#allocation3], %s340
          %s342 = sand.u32 %s34, 1
          %s343 = smul.addr %s342, 16
          %s344 = scalar_lea.vmem [#allocation2], %s343
          %s346 = ssub.s32 256, 256
          %347 = vsyncadd %s341, %s346
          %s348 = smul.addr %s24, 2
          %s349 = smul.addr %s348, 128
          %s350 = scalar_lea.hbm %s0, %s349
          %s351 = sshll.u32 %s344, 4
          %s352 = int_to_ptr.vmem [resolvable:$true] %s351
          %357 = dma.hbm_to_vmem [thread:$0]  %s350, 256, %s352, %s341, 128, 128, 8
        $region52: #{tpu_custom_call.1} parent=47 // pred_fallthru
          _
      $region48: #{tpu_custom_call.1} parent=5 // pred_fallthru
        _
      %p358 = scmp.le.s32.totalorder 1, %s24
      %p359 = scmp.lt.s32.totalorder %s24, 3
      %p360 = pnand %p358, %p359
      %p361 = pneg %p360
      // Predicated region
      $region53: #{tpu_custom_call.1} parent=5 // pred_check
        _
      $region54: #{tpu_custom_call.1} parent=5 // pred_check_branch
        %363 = sbr.rel (%p360) target = $region56
      $region55: #{tpu_custom_call.1} parent=5 // pred_region
        %s364 = ssub.s32 %s24, 1
        %s365 = sand.u32 %s37, 1
        %s366 = scalar_lea.sflag [#allocation3], %s365
        %s367 = sand.u32 %s37, 1
        %s368 = smul.addr %s367, 16
        %s369 = scalar_lea.vmem [#allocation2], %s368
        // Predicated region
        $region57: #{tpu_custom_call.1} parent=55 // pred_check
          %p370 = pneg %p50
        $region58: #{tpu_custom_call.1} parent=55 // pred_check_branch
          %372 = sbr.rel (%p370) target = $region60
        $region59: #{tpu_custom_call.1} parent=55 // pred_region
          %373 = dma.done %s366, 256
        $region60: #{tpu_custom_call.1} parent=55 // pred_fallthru
          _
        // Predicated region
        $region61: #{tpu_custom_call.1} parent=55 // pred_check
          %p374 = pneg %p71
        $region62: #{tpu_custom_call.1} parent=55 // pred_check_branch
          %376 = sbr.rel (%p374) target = $region64
        $region63: #{tpu_custom_call.1} parent=55 // pred_region
          %377 = dma.done [#allocation6], 384
        $region64: #{tpu_custom_call.1} parent=55 // pred_fallthru
          _
        // Predicated region
        $region65: #{tpu_custom_call.1} parent=55 // pred_check
          %p378 = pneg %p92
        $region66: #{tpu_custom_call.1} parent=55 // pred_check_branch
          %380 = sbr.rel (%p378) target = $region68
        $region67: #{tpu_custom_call.1} parent=55 // pred_region
          %381 = dma.done [#allocation6], 6144
        $region68: #{tpu_custom_call.1} parent=55 // pred_fallthru
          _
        // Predicated region
        $region69: #{tpu_custom_call.1} parent=55 // pred_check
          %p382 = pneg %p134
        $region70: #{tpu_custom_call.1} parent=55 // pred_check_branch
          %384 = sbr.rel (%p382) target = $region72
        $region71: #{tpu_custom_call.1} parent=55 // pred_region
          %385 = dma.done [#allocation9], 384
        $region72: #{tpu_custom_call.1} parent=55 // pred_fallthru
          _
        // Predicated region
        $region73: #{tpu_custom_call.1} parent=55 // pred_check
          %p386 = pneg %p155
        $region74: #{tpu_custom_call.1} parent=55 // pred_check_branch
          %388 = sbr.rel (%p386) target = $region76
        $region75: #{tpu_custom_call.1} parent=55 // pred_region
          %389 = dma.done [#allocation9], 6144
        $region76: #{tpu_custom_call.1} parent=55 // pred_fallthru
          _
        // Predicated region
        $region77: #{tpu_custom_call.1} parent=55 // pred_check
          %p390 = pneg %p197
        $region78: #{tpu_custom_call.1} parent=55 // pred_check_branch
          %392 = sbr.rel (%p390) target = $region80
        $region79: #{tpu_custom_call.1} parent=55 // pred_region
          %393 = dma.done [#allocation12], 2048
        $region80: #{tpu_custom_call.1} parent=55 // pred_fallthru
          _
        %s394 = sand.u32 %s37, 1
        %s395 = scalar_lea.sflag [#allocation3], %s394
        %s396 = sand.u32 %s37, 1
        %s397 = smul.addr %s396, 16
        %s398 = scalar_lea.vmem [#allocation2], %s397
        %p399 = pneg %p50
        %p400 = pneg %p47
        %p401 = pneg %p71
        %p402 = pneg %p68
        %p403 = pneg %p92
        %p404 = pneg %p89
        %p405 = pneg %p113
        %p406 = pneg %p110
        %p407 = pneg %p134
        %p408 = pneg %p131
        %p409 = pneg %p155
        %p410 = pneg %p152
        %p411 = pneg %p176
        %p412 = pneg %p173
        %p413 = pneg %p197
        %p414 = pneg %p194
        %p415 = pneg %p218
        %p416 = pneg %p215
        %p417 = pneg %p244
        %p418 = pneg %p241
        %s419 = sand.u32 %s231, 1
        %s420 = scalar_lea.sflag [#allocation4], %s419
        %s421 = sand.u32 %s231, 1
        %s422 = smul.addr %s421, 8
        %s423 = scalar_lea.vmem [#allocation13], %s422
        %v424 = vld [vmem:[%s369] sm:$0xff]
        %v425 = vld [vmem:[%s369 + $0x8] sm:$0xff]
        %v426 = vld [vmem:[#allocation5] sm:$0xff]
        %vm427 = vcmask 130048
        %v429 = vsel %vm427, %v426, 0
        %431 = vmatprep.subr.mxu0 0.0
        %432 = vmatpush1.msra.mxu0 %v424
        %433 = vmatprep.subr.mxu0 0.0
        %434 = vmatpush1.msra.mxu0 %v425
        %435 = vmatprep.subr.mxu0 0.0
        %436 = vmatpush1.msra.mxu0 0.0
        %437 = vmatprep.subr.mxu0 0.0
        %438 = vmatpush1.msra.mxu0 0.0
        %439 = vmatprep.subr.mxu0 0.0
        %440 = vmatpush1.msra.mxu0 0.0
        %441 = vmatprep.subr.mxu0 0.0
        %442 = vmatpush1.msra.mxu0 0.0
        %443 = vmatprep.subr.mxu0 0.0
        %444 = vmatpush1.msra.mxu0 0.0
        %445 = vmatprep.subr.mxu0 0.0
        %446 = vmatpush1.msra.mxu0 0.0
        %447 = vmatprep.subr.mxu0 0.0
        %448 = vmatpush1.msra.mxu0 0.0
        %449 = vmatprep.subr.mxu0 0.0
        %450 = vmatpush1.msra.mxu0 0.0
        %451 = vmatprep.subr.mxu0 0.0
        %452 = vmatpush1.msra.mxu0 0.0
        %453 = vmatprep.subr.mxu0 0.0
        %454 = vmatpush1.msra.mxu0 0.0
        %455 = vmatprep.subr.mxu0 0.0
        %456 = vmatpush1.msra.mxu0 0.0
        %457 = vmatprep.subr.mxu0 0.0
        %458 = vmatpush1.msra.mxu0 0.0
        %459 = vmatprep.subr.mxu0 0.0
        %460 = vmatpush1.msra.mxu0 0.0
        %461 = vmatprep.subr.mxu0 0.0
        %462 = vmatpush1.msra.mxu0 0.0
        %463 = vmatprep.subr.mxu0 0.0
        %464 = vmatpush1.msra.mxu0 0.0
        %465 = vmatprep.subr.mxu0 0.0
        %466 = vmatpush1.msra.mxu0 0.0
        %467 = vmatprep.subr.mxu0 0.0
        %468 = vmatpush1.msra.mxu0 0.0
        %469 = vmatprep.subr.mxu0 0.0
        %470 = vmatpush1.msra.mxu0 0.0
        %471 = vmatprep.subr.mxu0 0.0
        %472 = vmatpush1.msra.mxu0 0.0
        %473 = vmatprep.subr.mxu0 0.0
        %474 = vmatpush1.msra.mxu0 0.0
        %475 = vmatprep.subr.mxu0 0.0
        %476 = vmatpush1.msra.mxu0 0.0
        %477 = vmatprep.subr.mxu0 0.0
        %478 = vmatpush1.msra.mxu0 0.0
        %479 = vmatprep.subr.mxu0 0.0
        %480 = vmatpush1.msra.mxu0 0.0
        %481 = vmatprep.subr.mxu0 0.0
        %482 = vmatpush1.msra.mxu0 0.0
        %483 = vmatprep.subr.mxu0 0.0
        %484 = vmatpush1.msra.mxu0 0.0
        %485 = vmatprep.subr.mxu0 0.0
        %486 = vmatpush1.msra.mxu0 0.0
        %487 = vmatprep.subr.mxu0 0.0
        %488 = vmatpush1.msra.mxu0 0.0
        %489 = vmatprep.subr.mxu0 0.0
        %490 = vmatpush1.msra.mxu0 0.0
        %491 = vmatprep.subr.mxu0 0.0
        %492 = vmatpush1.msra.mxu0 0.0
        %493 = vmatprep.subr.mxu0 0.0
        %494 = vmatpush1.msra.mxu0 0.0
        %495 = vmatprep.mubr.f32.mxu0 0.0
        %496 = vmatmul.mubr.f32.gmra.mrb[0].mxu0 %v429
        %v497 = vpop.f32.mrb[0].mxu0
        %v498 = vadd.f32 0.0, %v497
        %v499 = vpop.f32.mrb[0].mxu0
        %500 = vdwg.mxu0
        %v501 = vld [vmem:[#allocation7] sm:$0xff]
        %v502 = vld [vmem:[#allocation7 + $0x8] sm:$0xff]
        %v503 = vld [vmem:[#allocation7 + $0x10] sm:$0xff]
        %v504 = vld [vmem:[#allocation7 + $0x18] sm:$0xff]
        %v505 = vld [vmem:[#allocation7 + $0x20] sm:$0xff]
        %v506 = vld [vmem:[#allocation7 + $0x28] sm:$0xff]
        %v507 = vld [vmem:[#allocation7 + $0x30] sm:$0xff]
        %v508 = vld [vmem:[#allocation7 + $0x38] sm:$0xff]
        %v509 = vld [vmem:[#allocation7 + $0x40] sm:$0xff]
        %v510 = vld [vmem:[#allocation7 + $0x48] sm:$0xff]
        %v511 = vld [vmem:[#allocation7 + $0x50] sm:$0xff]
        %v512 = vld [vmem:[#allocation7 + $0x58] sm:$0xff]
        %v513 = vld [vmem:[#allocation7 + $0x60] sm:$0xff]
        %v514 = vld [vmem:[#allocation7 + $0x68] sm:$0xff]
        %v515 = vld [vmem:[#allocation7 + $0x70] sm:$0xff]
        %v516 = vld [vmem:[#allocation7 + $0x78] sm:$0xff]
        %s517 = scalar_lea.vmem [#allocation5], 8
        %v518 = vld [vmem:[%s517] sm:$0xff]
        %v520 = vsel %vm427, %v518, 0
        %522 = vmatprep.subr.mxu0 0.0
        %523 = vmatpush1.msra.mxu0 %v424
        %524 = vmatprep.subr.mxu0 0.0
        %525 = vmatpush1.msra.mxu0 %v425
        %526 = vmatprep.subr.mxu0 0.0
        %527 = vmatpush1.msra.mxu0 0.0
        %528 = vmatprep.subr.mxu0 0.0
        %529 = vmatpush1.msra.mxu0 0.0
        %530 = vmatprep.subr.mxu0 0.0
        %531 = vmatpush1.msra.mxu0 0.0
        %532 = vmatprep.subr.mxu0 0.0
        %533 = vmatpush1.msra.mxu0 0.0
        %534 = vmatprep.subr.mxu0 0.0
        %535 = vmatpush1.msra.mxu0 0.0
        %536 = vmatprep.subr.mxu0 0.0
        %537 = vmatpush1.msra.mxu0 0.0
        %538 = vmatprep.subr.mxu0 0.0
        %539 = vmatpush1.msra.mxu0 0.0
        %540 = vmatprep.subr.mxu0 0.0
        %541 = vmatpush1.msra.mxu0 0.0
        %542 = vmatprep.subr.mxu0 0.0
        %543 = vmatpush1.msra.mxu0 0.0
        %544 = vmatprep.subr.mxu0 0.0
        %545 = vmatpush1.msra.mxu0 0.0
        %546 = vmatprep.subr.mxu0 0.0
        %547 = vmatpush1.msra.mxu0 0.0
        %548 = vmatprep.subr.mxu0 0.0
        %549 = vmatpush1.msra.mxu0 0.0
        %550 = vmatprep.subr.mxu0 0.0
        %551 = vmatpush1.msra.mxu0 0.0
        %552 = vmatprep.subr.mxu0 0.0
        %553 = vmatpush1.msra.mxu0 0.0
        %554 = vmatprep.subr.mxu0 0.0
        %555 = vmatpush1.msra.mxu0 0.0
        %556 = vmatprep.subr.mxu0 0.0
        %557 = vmatpush1.msra.mxu0 0.0
        %558 = vmatprep.subr.mxu0 0.0
        %559 = vmatpush1.msra.mxu0 0.0
        %560 = vmatprep.subr.mxu0 0.0
        %561 = vmatpush1.msra.mxu0 0.0
        %562 = vmatprep.subr.mxu0 0.0
        %563 = vmatpush1.msra.mxu0 0.0
        %564 = vmatprep.subr.mxu0 0.0
        %565 = vmatpush1.msra.mxu0 0.0
        %566 = vmatprep.subr.mxu0 0.0
        %567 = vmatpush1.msra.mxu0 0.0
        %568 = vmatprep.subr.mxu0 0.0
        %569 = vmatpush1.msra.mxu0 0.0
        %570 = vmatprep.subr.mxu0 0.0
        %571 = vmatpush1.msra.mxu0 0.0
        %572 = vmatprep.subr.mxu0 0.0
        %573 = vmatpush1.msra.mxu0 0.0
        %574 = vmatprep.subr.mxu0 0.0
        %575 = vmatpush1.msra.mxu0 0.0
        %576 = vmatprep.subr.mxu0 0.0
        %577 = vmatpush1.msra.mxu0 0.0
        %578 = vmatprep.subr.mxu0 0.0
        %579 = vmatpush1.msra.mxu0 0.0
        %580 = vmatprep.subr.mxu0 0.0
        %581 = vmatpush1.msra.mxu0 0.0
        %582 = vmatprep.subr.mxu0 0.0
        %583 = vmatpush1.msra.mxu0 0.0
        %584 = vmatprep.subr.mxu0 0.0
        %585 = vmatpush1.msra.mxu0 0.0
        %586 = vmatprep.mubr.f32.mxu0 0.0
        %587 = vmatmul.mubr.f32.gmra.mrb[0].mxu0 %v520
        %v588 = vpop.f32.mrb[0].mxu0
        %v589 = vadd.f32 0.0, %v588
        %v590 = vpop.f32.mrb[0].mxu0
        %591 = vdwg.mxu0
        %s592 = scalar_lea.vmem [#allocation7], 128
        %v593 = vld [vmem:[%s592] sm:$0xff]
        %v594 = vld [vmem:[%s592 + $0x8] sm:$0xff]
        %v595 = vld [vmem:[%s592 + $0x10] sm:$0xff]
        %v596 = vld [vmem:[%s592 + $0x18] sm:$0xff]
        %v597 = vld [vmem:[%s592 + $0x20] sm:$0xff]
        %v598 = vld [vmem:[%s592 + $0x28] sm:$0xff]
        %v599 = vld [vmem:[%s592 + $0x30] sm:$0xff]
        %v600 = vld [vmem:[%s592 + $0x38] sm:$0xff]
        %v601 = vld [vmem:[%s592 + $0x40] sm:$0xff]
        %v602 = vld [vmem:[%s592 + $0x48] sm:$0xff]
        %v603 = vld [vmem:[%s592 + $0x50] sm:$0xff]
        %v604 = vld [vmem:[%s592 + $0x58] sm:$0xff]
        %v605 = vld [vmem:[%s592 + $0x60] sm:$0xff]
        %v606 = vld [vmem:[%s592 + $0x68] sm:$0xff]
        %v607 = vld [vmem:[%s592 + $0x70] sm:$0xff]
        %v608 = vld [vmem:[%s592 + $0x78] sm:$0xff]
        %609 = vmatprep.subr.mxu0 0.0
        %610 = vmatpush1.msra.mxu0 %v593
        %611 = vmatprep.subr.mxu0 0.0
        %612 = vmatpush1.msra.mxu0 %v594
        %613 = vmatprep.subr.mxu0 0.0
        %614 = vmatpush1.msra.mxu0 %v595
        %615 = vmatprep.subr.mxu0 0.0
        %616 = vmatpush1.msra.mxu0 %v596
        %617 = vmatprep.subr.mxu0 0.0
        %618 = vmatpush1.msra.mxu0 %v597
        %619 = vmatprep.subr.mxu0 0.0
        %620 = vmatpush1.msra.mxu0 %v598
        %621 = vmatprep.subr.mxu0 0.0
        %622 = vmatpush1.msra.mxu0 %v599
        %623 = vmatprep.subr.mxu0 0.0
        %624 = vmatpush1.msra.mxu0 %v600
        %625 = vmatprep.subr.mxu0 0.0
        %626 = vmatpush1.msra.mxu0 %v601
        %627 = vmatprep.subr.mxu0 0.0
        %628 = vmatpush1.msra.mxu0 %v602
        %629 = vmatprep.subr.mxu0 0.0
        %630 = vmatpush1.msra.mxu0 %v603
        %631 = vmatprep.subr.mxu0 0.0
        %632 = vmatpush1.msra.mxu0 %v604
        %633 = vmatprep.subr.mxu0 0.0
        %634 = vmatpush1.msra.mxu0 %v605
        %635 = vmatprep.subr.mxu0 0.0
        %636 = vmatpush1.msra.mxu0 %v606
        %637 = vmatprep.subr.mxu0 0.0
        %638 = vmatpush1.msra.mxu0 %v607
        %639 = vmatprep.subr.mxu0 0.0
        %640 = vmatpush1.msra.mxu0 %v608
        %641 = vmatprep.subr.mxu0 0.0
        %642 = vmatpush1.msra.mxu0 0.0
        %643 = vmatprep.subr.mxu0 0.0
        %644 = vmatpush1.msra.mxu0 0.0
        %645 = vmatprep.subr.mxu0 0.0
        %646 = vmatpush1.msra.mxu0 0.0
        %647 = vmatprep.subr.mxu0 0.0
        %648 = vmatpush1.msra.mxu0 0.0
        %649 = vmatprep.subr.mxu0 0.0
        %650 = vmatpush1.msra.mxu0 0.0
        %651 = vmatprep.subr.mxu0 0.0
        %652 = vmatpush1.msra.mxu0 0.0
        %653 = vmatprep.subr.mxu0 0.0
        %654 = vmatpush1.msra.mxu0 0.0
        %655 = vmatprep.subr.mxu0 0.0
        %656 = vmatpush1.msra.mxu0 0.0
        %657 = vmatprep.subr.mxu0 0.0
        %658 = vmatpush1.msra.mxu0 0.0
        %659 = vmatprep.subr.mxu0 0.0
        %660 = vmatpush1.msra.mxu0 0.0
        %661 = vmatprep.subr.mxu0 0.0
        %662 = vmatpush1.msra.mxu0 0.0
        %663 = vmatprep.subr.mxu0 0.0
        %664 = vmatpush1.msra.mxu0 0.0
        %665 = vmatprep.subr.mxu0 0.0
        %666 = vmatpush1.msra.mxu0 0.0
        %667 = vmatprep.subr.mxu0 0.0
        %668 = vmatpush1.msra.mxu0 0.0
        %669 = vmatprep.subr.mxu0 0.0
        %670 = vmatpush1.msra.mxu0 0.0
        %671 = vmatprep.subr.mxu0 0.0
        %672 = vmatpush1.msra.mxu0 0.0
        %673 = vmatprep.mubr.f32.mxu0 0.0
        %674 = vmatmul.mubr.f32.gmra.mrb[0].mxu0 %v589
        %v675 = vpop.f32.mrb[0].mxu0
        %v676 = vadd.f32 0.0, %v675
        %v677 = vpop.f32.mrb[0].mxu0
        %678 = vdwg.mxu0
        %679 = vmatprep.subr.mxu0 0.0
        %680 = vmatpush1.msra.mxu0 %v501
        %681 = vmatprep.subr.mxu0 0.0
        %682 = vmatpush1.msra.mxu0 %v502
        %683 = vmatprep.subr.mxu0 0.0
        %684 = vmatpush1.msra.mxu0 %v503
        %685 = vmatprep.subr.mxu0 0.0
        %686 = vmatpush1.msra.mxu0 %v504
        %687 = vmatprep.subr.mxu0 0.0
        %688 = vmatpush1.msra.mxu0 %v505
        %689 = vmatprep.subr.mxu0 0.0
        %690 = vmatpush1.msra.mxu0 %v506
        %691 = vmatprep.subr.mxu0 0.0
        %692 = vmatpush1.msra.mxu0 %v507
        %693 = vmatprep.subr.mxu0 0.0
        %694 = vmatpush1.msra.mxu0 %v508
        %695 = vmatprep.subr.mxu0 0.0
        %696 = vmatpush1.msra.mxu0 %v509
        %697 = vmatprep.subr.mxu0 0.0
        %698 = vmatpush1.msra.mxu0 %v510
        %699 = vmatprep.subr.mxu0 0.0
        %700 = vmatpush1.msra.mxu0 %v511
        %701 = vmatprep.subr.mxu0 0.0
        %702 = vmatpush1.msra.mxu0 %v512
        %703 = vmatprep.subr.mxu0 0.0
        %704 = vmatpush1.msra.mxu0 %v513
        %705 = vmatprep.subr.mxu0 0.0
        %706 = vmatpush1.msra.mxu0 %v514
        %707 = vmatprep.subr.mxu0 0.0
        %708 = vmatpush1.msra.mxu0 %v515
        %709 = vmatprep.subr.mxu0 0.0
        %710 = vmatpush1.msra.mxu0 %v516
        %711 = vmatprep.subr.mxu0 0.0
        %712 = vmatpush1.msra.mxu0 0.0
        %713 = vmatprep.subr.mxu0 0.0
        %714 = vmatpush1.msra.mxu0 0.0
        %715 = vmatprep.subr.mxu0 0.0
        %716 = vmatpush1.msra.mxu0 0.0
        %717 = vmatprep.subr.mxu0 0.0
        %718 = vmatpush1.msra.mxu0 0.0
        %719 = vmatprep.subr.mxu0 0.0
        %720 = vmatpush1.msra.mxu0 0.0
        %721 = vmatprep.subr.mxu0 0.0
        %722 = vmatpush1.msra.mxu0 0.0
        %723 = vmatprep.subr.mxu0 0.0
        %724 = vmatpush1.msra.mxu0 0.0
        %725 = vmatprep.subr.mxu0 0.0
        %726 = vmatpush1.msra.mxu0 0.0
        %727 = vmatprep.subr.mxu0 0.0
        %728 = vmatpush1.msra.mxu0 0.0
        %729 = vmatprep.subr.mxu0 0.0
        %730 = vmatpush1.msra.mxu0 0.0
        %731 = vmatprep.subr.mxu0 0.0
        %732 = vmatpush1.msra.mxu0 0.0
        %733 = vmatprep.subr.mxu0 0.0
        %734 = vmatpush1.msra.mxu0 0.0
        %735 = vmatprep.subr.mxu0 0.0
        %736 = vmatpush1.msra.mxu0 0.0
        %737 = vmatprep.subr.mxu0 0.0
        %738 = vmatpush1.msra.mxu0 0.0
        %739 = vmatprep.subr.mxu0 0.0
        %740 = vmatpush1.msra.mxu0 0.0
        %741 = vmatprep.subr.mxu0 0.0
        %742 = vmatpush1.msra.mxu0 0.0
        %743 = vmatprep.mubr.f32.mxu0 0.0
        %744 = vmatmul.mubr.f32.gmra.mrb[0].mxu0 %v498
        %v745 = vpop.f32.mrb[0].mxu0
        %v746 = vadd.f32 %v676, %v745
        %v747 = vpop.f32.mrb[0].mxu0
        %748 = vdwg.mxu0
        %s749 = scalar_lea.vmem [#allocation5], 16
        %v750 = vld [vmem:[%s749] sm:$0xff]
        %v752 = vsel %vm427, %v750, 0
        %754 = vmatprep.subr.mxu0 0.0
        %755 = vmatpush1.msra.mxu0 %v424
        %756 = vmatprep.subr.mxu0 0.0
        %757 = vmatpush1.msra.mxu0 %v425
        %758 = vmatprep.subr.mxu0 0.0
        %759 = vmatpush1.msra.mxu0 0.0
        %760 = vmatprep.subr.mxu0 0.0
        %761 = vmatpush1.msra.mxu0 0.0
        %762 = vmatprep.subr.mxu0 0.0
        %763 = vmatpush1.msra.mxu0 0.0
        %764 = vmatprep.subr.mxu0 0.0
        %765 = vmatpush1.msra.mxu0 0.0
        %766 = vmatprep.subr.mxu0 0.0
        %767 = vmatpush1.msra.mxu0 0.0
        %768 = vmatprep.subr.mxu0 0.0
        %769 = vmatpush1.msra.mxu0 0.0
        %770 = vmatprep.subr.mxu0 0.0
        %771 = vmatpush1.msra.mxu0 0.0
        %772 = vmatprep.subr.mxu0 0.0
        %773 = vmatpush1.msra.mxu0 0.0
        %774 = vmatprep.subr.mxu0 0.0
        %775 = vmatpush1.msra.mxu0 0.0
        %776 = vmatprep.subr.mxu0 0.0
        %777 = vmatpush1.msra.mxu0 0.0
        %778 = vmatprep.subr.mxu0 0.0
        %779 = vmatpush1.msra.mxu0 0.0
        %780 = vmatprep.subr.mxu0 0.0
        %781 = vmatpush1.msra.mxu0 0.0
        %782 = vmatprep.subr.mxu0 0.0
        %783 = vmatpush1.msra.mxu0 0.0
        %784 = vmatprep.subr.mxu0 0.0
        %785 = vmatpush1.msra.mxu0 0.0
        %786 = vmatprep.subr.mxu0 0.0
        %787 = vmatpush1.msra.mxu0 0.0
        %788 = vmatprep.subr.mxu0 0.0
        %789 = vmatpush1.msra.mxu0 0.0
        %790 = vmatprep.subr.mxu0 0.0
        %791 = vmatpush1.msra.mxu0 0.0
        %792 = vmatprep.subr.mxu0 0.0
        %793 = vmatpush1.msra.mxu0 0.0
        %794 = vmatprep.subr.mxu0 0.0
        %795 = vmatpush1.msra.mxu0 0.0
        %796 = vmatprep.subr.mxu0 0.0
        %797 = vmatpush1.msra.mxu0 0.0
        %798 = vmatprep.subr.mxu0 0.0
        %799 = vmatpush1.msra.mxu0 0.0
        %800 = vmatprep.subr.mxu0 0.0
        %801 = vmatpush1.msra.mxu0 0.0
        %802 = vmatprep.subr.mxu0 0.0
        %803 = vmatpush1.msra.mxu0 0.0
        %804 = vmatprep.subr.mxu0 0.0
        %805 = vmatpush1.msra.mxu0 0.0
        %806 = vmatprep.subr.mxu0 0.0
        %807 = vmatpush1.msra.mxu0 0.0
        %808 = vmatprep.subr.mxu0 0.0
        %809 = vmatpush1.msra.mxu0 0.0
        %810 = vmatprep.subr.mxu0 0.0
        %811 = vmatpush1.msra.mxu0 0.0
        %812 = vmatprep.subr.mxu0 0.0
        %813 = vmatpush1.msra.mxu0 0.0
        %814 = vmatprep.subr.mxu0 0.0
        %815 = vmatpush1.msra.mxu0 0.0
        %816 = vmatprep.subr.mxu0 0.0
        %817 = vmatpush1.msra.mxu0 0.0
        %818 = vmatprep.mubr.f32.mxu0 0.0
        %819 = vmatmul.mubr.f32.gmra.mrb[0].mxu0 %v752
        %v820 = vpop.f32.mrb[0].mxu0
        %v821 = vadd.f32 0.0, %v820
        %v822 = vpop.f32.mrb[0].mxu0
        %823 = vdwg.mxu0
        %s824 = scalar_lea.vmem [#allocation7], 256
        %v825 = vld [vmem:[%s824] sm:$0xff]
        %v826 = vld [vmem:[%s824 + $0x8] sm:$0xff]
        %v827 = vld [vmem:[%s824 + $0x10] sm:$0xff]
        %v828 = vld [vmem:[%s824 + $0x18] sm:$0xff]
        %v829 = vld [vmem:[%s824 + $0x20] sm:$0xff]
        %v830 = vld [vmem:[%s824 + $0x28] sm:$0xff]
        %v831 = vld [vmem:[%s824 + $0x30] sm:$0xff]
        %v832 = vld [vmem:[%s824 + $0x38] sm:$0xff]
        %v833 = vld [vmem:[%s824 + $0x40] sm:$0xff]
        %v834 = vld [vmem:[%s824 + $0x48] sm:$0xff]
        %v835 = vld [vmem:[%s824 + $0x50] sm:$0xff]
        %v836 = vld [vmem:[%s824 + $0x58] sm:$0xff]
        %v837 = vld [vmem:[%s824 + $0x60] sm:$0xff]
        %v838 = vld [vmem:[%s824 + $0x68] sm:$0xff]
        %v839 = vld [vmem:[%s824 + $0x70] sm:$0xff]
        %v840 = vld [vmem:[%s824 + $0x78] sm:$0xff]
        %841 = vmatprep.subr.mxu0 0.0
        %842 = vmatpush1.msra.mxu0 %v825
        %843 = vmatprep.subr.mxu0 0.0
        %844 = vmatpush1.msra.mxu0 %v826
        %845 = vmatprep.subr.mxu0 0.0
        %846 = vmatpush1.msra.mxu0 %v827
        %847 = vmatprep.subr.mxu0 0.0
        %848 = vmatpush1.msra.mxu0 %v828
        %849 = vmatprep.subr.mxu0 0.0
        %850 = vmatpush1.msra.mxu0 %v829
        %851 = vmatprep.subr.mxu0 0.0
        %852 = vmatpush1.msra.mxu0 %v830
        %853 = vmatprep.subr.mxu0 0.0
        %854 = vmatpush1.msra.mxu0 %v831
        %855 = vmatprep.subr.mxu0 0.0
        %856 = vmatpush1.msra.mxu0 %v832
        %857 = vmatprep.subr.mxu0 0.0
        %858 = vmatpush1.msra.mxu0 %v833
        %859 = vmatprep.subr.mxu0 0.0
        %860 = vmatpush1.msra.mxu0 %v834
        %861 = vmatprep.subr.mxu0 0.0
        %862 = vmatpush1.msra.mxu0 %v835
        %863 = vmatprep.subr.mxu0 0.0
        %864 = vmatpush1.msra.mxu0 %v836
        %865 = vmatprep.subr.mxu0 0.0
        %866 = vmatpush1.msra.mxu0 %v837
        %867 = vmatprep.subr.mxu0 0.0
        %868 = vmatpush1.msra.mxu0 %v838
        %869 = vmatprep.subr.mxu0 0.0
        %870 = vmatpush1.msra.mxu0 %v839
        %871 = vmatprep.subr.mxu0 0.0
        %872 = vmatpush1.msra.mxu0 %v840
        %873 = vmatprep.subr.mxu0 0.0
        %874 = vmatpush1.msra.mxu0 0.0
        %875 = vmatprep.subr.mxu0 0.0
        %876 = vmatpush1.msra.mxu0 0.0
        %877 = vmatprep.subr.mxu0 0.0
        %878 = vmatpush1.msra.mxu0 0.0
        %879 = vmatprep.subr.mxu0 0.0
        %880 = vmatpush1.msra.mxu0 0.0
        %881 = vmatprep.subr.mxu0 0.0
        %882 = vmatpush1.msra.mxu0 0.0
        %883 = vmatprep.subr.mxu0 0.0
        %884 = vmatpush1.msra.mxu0 0.0
        %885 = vmatprep.subr.mxu0 0.0
        %886 = vmatpush1.msra.mxu0 0.0
        %887 = vmatprep.subr.mxu0 0.0
        %888 = vmatpush1.msra.mxu0 0.0
        %889 = vmatprep.subr.mxu0 0.0
        %890 = vmatpush1.msra.mxu0 0.0
        %891 = vmatprep.subr.mxu0 0.0
        %892 = vmatpush1.msra.mxu0 0.0
        %893 = vmatprep.subr.mxu0 0.0
        %894 = vmatpush1.msra.mxu0 0.0
        %895 = vmatprep.subr.mxu0 0.0
        %896 = vmatpush1.msra.mxu0 0.0
        %897 = vmatprep.subr.mxu0 0.0
        %898 = vmatpush1.msra.mxu0 0.0
        %899 = vmatprep.subr.mxu0 0.0
        %900 = vmatpush1.msra.mxu0 0.0
        %901 = vmatprep.subr.mxu0 0.0
        %902 = vmatpush1.msra.mxu0 0.0
        %903 = vmatprep.subr.mxu0 0.0
        %904 = vmatpush1.msra.mxu0 0.0
        %905 = vmatprep.mubr.f32.mxu0 0.0
        %906 = vmatmul.mubr.f32.gmra.mrb[0].mxu0 %v821
        %v907 = vpop.f32.mrb[0].mxu0
        %v908 = vadd.f32 0.0, %v907
        %v909 = vpop.f32.mrb[0].mxu0
        %910 = vdwg.mxu0
        %v911 = vadd.f32 %v746, %v908
        %v912 = vld [vmem:[%s3] sm:$0x1]
        %v914 = vlaneseq
        %v915 = vshrl.u32 %v914, 7
        %v916 = vsub.s32 0, %v915
        %v917 = vrot.slane %v912, %v916
        %v919 = vadd.f32 %v911, %v917
        %v920 = vmax.f32 %v919, 0.0
        %v921 = vld [vmem:[#allocation8] sm:$0xff]
        %vm922 = vcmask 64512
        %v924 = vsel %vm922, %v921, 0
        %926 = vmatprep.subr.mxu0 0.0
        %927 = vmatpush1.msra.mxu0 %v920
        %928 = vmatprep.subr.mxu0 0.0
        %929 = vmatpush1.msra.mxu0 0.0
        %930 = vmatprep.subr.mxu0 0.0
        %931 = vmatpush1.msra.mxu0 0.0
        %932 = vmatprep.subr.mxu0 0.0
        %933 = vmatpush1.msra.mxu0 0.0
        %934 = vmatprep.subr.mxu0 0.0
        %935 = vmatpush1.msra.mxu0 0.0
        %936 = vmatprep.subr.mxu0 0.0
        %937 = vmatpush1.msra.mxu0 0.0
        %938 = vmatprep.subr.mxu0 0.0
        %939 = vmatpush1.msra.mxu0 0.0
        %940 = vmatprep.subr.mxu0 0.0
        %941 = vmatpush1.msra.mxu0 0.0
        %942 = vmatprep.subr.mxu0 0.0
        %943 = vmatpush1.msra.mxu0 0.0
        %944 = vmatprep.subr.mxu0 0.0
        %945 = vmatpush1.msra.mxu0 0.0
        %946 = vmatprep.subr.mxu0 0.0
        %947 = vmatpush1.msra.mxu0 0.0
        %948 = vmatprep.subr.mxu0 0.0
        %949 = vmatpush1.msra.mxu0 0.0
        %950 = vmatprep.subr.mxu0 0.0
        %951 = vmatpush1.msra.mxu0 0.0
        %952 = vmatprep.subr.mxu0 0.0
        %953 = vmatpush1.msra.mxu0 0.0
        %954 = vmatprep.subr.mxu0 0.0
        %955 = vmatpush1.msra.mxu0 0.0
        %956 = vmatprep.subr.mxu0 0.0
        %957 = vmatpush1.msra.mxu0 0.0
        %958 = vmatprep.subr.mxu0 0.0
        %959 = vmatpush1.msra.mxu0 0.0
        %960 = vmatprep.subr.mxu0 0.0
        %961 = vmatpush1.msra.mxu0 0.0
        %962 = vmatprep.subr.mxu0 0.0
        %963 = vmatpush1.msra.mxu0 0.0
        %964 = vmatprep.subr.mxu0 0.0
        %965 = vmatpush1.msra.mxu0 0.0
        %966 = vmatprep.subr.mxu0 0.0
        %967 = vmatpush1.msra.mxu0 0.0
        %968 = vmatprep.subr.mxu0 0.0
        %969 = vmatpush1.msra.mxu0 0.0
        %970 = vmatprep.subr.mxu0 0.0
        %971 = vmatpush1.msra.mxu0 0.0
        %972 = vmatprep.subr.mxu0 0.0
        %973 = vmatpush1.msra.mxu0 0.0
        %974 = vmatprep.subr.mxu0 0.0
        %975 = vmatpush1.msra.mxu0 0.0
        %976 = vmatprep.subr.mxu0 0.0
        %977 = vmatpush1.msra.mxu0 0.0
        %978 = vmatprep.subr.mxu0 0.0
        %979 = vmatpush1.msra.mxu0 0.0
        %980 = vmatprep.subr.mxu0 0.0
        %981 = vmatpush1.msra.mxu0 0.0
        %982 = vmatprep.subr.mxu0 0.0
        %983 = vmatpush1.msra.mxu0 0.0
        %984 = vmatprep.subr.mxu0 0.0
        %985 = vmatpush1.msra.mxu0 0.0
        %986 = vmatprep.subr.mxu0 0.0
        %987 = vmatpush1.msra.mxu0 0.0
        %988 = vmatprep.subr.mxu0 0.0
        %989 = vmatpush1.msra.mxu0 0.0
        %990 = vmatprep.mubr.f32.mxu0 0.0
        %991 = vmatmul.mubr.f32.gmra.mrb[0].mxu0 %v924
        %v992 = vpop.f32.mrb[0].mxu0
        %v993 = vadd.f32 0.0, %v992
        %v994 = vpop.f32.mrb[0].mxu0
        %995 = vdwg.mxu0
        %v996 = vld [vmem:[#allocation10] sm:$0xff]
        %v997 = vld [vmem:[#allocation10 + $0x8] sm:$0xff]
        %v998 = vld [vmem:[#allocation10 + $0x10] sm:$0xff]
        %v999 = vld [vmem:[#allocation10 + $0x18] sm:$0xff]
        %v1000 = vld [vmem:[#allocation10 + $0x20] sm:$0xff]
        %v1001 = vld [vmem:[#allocation10 + $0x28] sm:$0xff]
        %v1002 = vld [vmem:[#allocation10 + $0x30] sm:$0xff]
        %v1003 = vld [vmem:[#allocation10 + $0x38] sm:$0xff]
        %v1004 = vld [vmem:[#allocation10 + $0x40] sm:$0xff]
        %v1005 = vld [vmem:[#allocation10 + $0x48] sm:$0xff]
        %v1006 = vld [vmem:[#allocation10 + $0x50] sm:$0xff]
        %v1007 = vld [vmem:[#allocation10 + $0x58] sm:$0xff]
        %v1008 = vld [vmem:[#allocation10 + $0x60] sm:$0xff]
        %v1009 = vld [vmem:[#allocation10 + $0x68] sm:$0xff]
        %v1010 = vld [vmem:[#allocation10 + $0x70] sm:$0xff]
        %v1011 = vld [vmem:[#allocation10 + $0x78] sm:$0xff]
        %s1012 = scalar_lea.vmem [#allocation10], 128
        %v1013 = vld [vmem:[%s1012] sm:$0xff]
        %v1014 = vld [vmem:[%s1012 + $0x8] sm:$0xff]
        %v1015 = vld [vmem:[%s1012 + $0x10] sm:$0xff]
        %v1016 = vld [vmem:[%s1012 + $0x18] sm:$0xff]
        %v1017 = vld [vmem:[%s1012 + $0x20] sm:$0xff]
        %v1018 = vld [vmem:[%s1012 + $0x28] sm:$0xff]
        %v1019 = vld [vmem:[%s1012 + $0x30] sm:$0xff]
        %v1020 = vld [vmem:[%s1012 + $0x38] sm:$0xff]
        %v1021 = vld [vmem:[%s1012 + $0x40] sm:$0xff]
        %v1022 = vld [vmem:[%s1012 + $0x48] sm:$0xff]
        %v1023 = vld [vmem:[%s1012 + $0x50] sm:$0xff]
        %v1024 = vld [vmem:[%s1012 + $0x58] sm:$0xff]
        %v1025 = vld [vmem:[%s1012 + $0x60] sm:$0xff]
        %v1026 = vld [vmem:[%s1012 + $0x68] sm:$0xff]
        %v1027 = vld [vmem:[%s1012 + $0x70] sm:$0xff]
        %v1028 = vld [vmem:[%s1012 + $0x78] sm:$0xff]
        %1029 = vmatprep.subr.mxu0 0.0
        %1030 = vmatpush1.msra.mxu0 %v1013
        %1031 = vmatprep.subr.mxu0 0.0
        %1032 = vmatpush1.msra.mxu0 %v1014
        %1033 = vmatprep.subr.mxu0 0.0
        %1034 = vmatpush1.msra.mxu0 %v1015
        %1035 = vmatprep.subr.mxu0 0.0
        %1036 = vmatpush1.msra.mxu0 %v1016
        %1037 = vmatprep.subr.mxu0 0.0
        %1038 = vmatpush1.msra.mxu0 %v1017
        %1039 = vmatprep.subr.mxu0 0.0
        %1040 = vmatpush1.msra.mxu0 %v1018
        %1041 = vmatprep.subr.mxu0 0.0
        %1042 = vmatpush1.msra.mxu0 %v1019
        %1043 = vmatprep.subr.mxu0 0.0
        %1044 = vmatpush1.msra.mxu0 %v1020
        %1045 = vmatprep.subr.mxu0 0.0
        %1046 = vmatpush1.msra.mxu0 %v1021
        %1047 = vmatprep.subr.mxu0 0.0
        %1048 = vmatpush1.msra.mxu0 %v1022
        %1049 = vmatprep.subr.mxu0 0.0
        %1050 = vmatpush1.msra.mxu0 %v1023
        %1051 = vmatprep.subr.mxu0 0.0
        %1052 = vmatpush1.msra.mxu0 %v1024
        %1053 = vmatprep.subr.mxu0 0.0
        %1054 = vmatpush1.msra.mxu0 %v1025
        %1055 = vmatprep.subr.mxu0 0.0
        %1056 = vmatpush1.msra.mxu0 %v1026
        %1057 = vmatprep.subr.mxu0 0.0
        %1058 = vmatpush1.msra.mxu0 %v1027
        %1059 = vmatprep.subr.mxu0 0.0
        %1060 = vmatpush1.msra.mxu0 %v1028
        %1061 = vmatprep.subr.mxu0 0.0
        %1062 = vmatpush1.msra.mxu0 0.0
        %1063 = vmatprep.subr.mxu0 0.0
        %1064 = vmatpush1.msra.mxu0 0.0
        %1065 = vmatprep.subr.mxu0 0.0
        %1066 = vmatpush1.msra.mxu0 0.0
        %1067 = vmatprep.subr.mxu0 0.0
        %1068 = vmatpush1.msra.mxu0 0.0
        %1069 = vmatprep.subr.mxu0 0.0
        %1070 = vmatpush1.msra.mxu0 0.0
        %1071 = vmatprep.subr.mxu0 0.0
        %1072 = vmatpush1.msra.mxu0 0.0
        %1073 = vmatprep.subr.mxu0 0.0
        %1074 = vmatpush1.msra.mxu0 0.0
        %1075 = vmatprep.subr.mxu0 0.0
        %1076 = vmatpush1.msra.mxu0 0.0
        %1077 = vmatprep.subr.mxu0 0.0
        %1078 = vmatpush1.msra.mxu0 0.0
        %1079 = vmatprep.subr.mxu0 0.0
        %1080 = vmatpush1.msra.mxu0 0.0
        %1081 = vmatprep.subr.mxu0 0.0
        %1082 = vmatpush1.msra.mxu0 0.0
        %1083 = vmatprep.subr.mxu0 0.0
        %1084 = vmatpush1.msra.mxu0 0.0
        %1085 = vmatprep.subr.mxu0 0.0
        %1086 = vmatpush1.msra.mxu0 0.0
        %1087 = vmatprep.subr.mxu0 0.0
        %1088 = vmatpush1.msra.mxu0 0.0
        %1089 = vmatprep.subr.mxu0 0.0
        %1090 = vmatpush1.msra.mxu0 0.0
        %1091 = vmatprep.subr.mxu0 0.0
        %1092 = vmatpush1.msra.mxu0 0.0
        %1093 = vmatprep.mubr.f32.mxu0 0.0
        %1094 = vmatmul.mubr.f32.gmra.mrb[0].mxu0 %v920
        %v1095 = vpop.f32.mrb[0].mxu0
        %v1096 = vadd.f32 0.0, %v1095
        %v1097 = vpop.f32.mrb[0].mxu0
        %1098 = vdwg.mxu0
        %1099 = vmatprep.subr.mxu0 0.0
        %1100 = vmatpush1.msra.mxu0 %v996
        %1101 = vmatprep.subr.mxu0 0.0
        %1102 = vmatpush1.msra.mxu0 %v997
        %1103 = vmatprep.subr.mxu0 0.0
        %1104 = vmatpush1.msra.mxu0 %v998
        %1105 = vmatprep.subr.mxu0 0.0
        %1106 = vmatpush1.msra.mxu0 %v999
        %1107 = vmatprep.subr.mxu0 0.0
        %1108 = vmatpush1.msra.mxu0 %v1000
        %1109 = vmatprep.subr.mxu0 0.0
        %1110 = vmatpush1.msra.mxu0 %v1001
        %1111 = vmatprep.subr.mxu0 0.0
        %1112 = vmatpush1.msra.mxu0 %v1002
        %1113 = vmatprep.subr.mxu0 0.0
        %1114 = vmatpush1.msra.mxu0 %v1003
        %1115 = vmatprep.subr.mxu0 0.0
        %1116 = vmatpush1.msra.mxu0 %v1004
        %1117 = vmatprep.subr.mxu0 0.0
        %1118 = vmatpush1.msra.mxu0 %v1005
        %1119 = vmatprep.subr.mxu0 0.0
        %1120 = vmatpush1.msra.mxu0 %v1006
        %1121 = vmatprep.subr.mxu0 0.0
        %1122 = vmatpush1.msra.mxu0 %v1007
        %1123 = vmatprep.subr.mxu0 0.0
        %1124 = vmatpush1.msra.mxu0 %v1008
        %1125 = vmatprep.subr.mxu0 0.0
        %1126 = vmatpush1.msra.mxu0 %v1009
        %1127 = vmatprep.subr.mxu0 0.0
        %1128 = vmatpush1.msra.mxu0 %v1010
        %1129 = vmatprep.subr.mxu0 0.0
        %1130 = vmatpush1.msra.mxu0 %v1011
        %1131 = vmatprep.subr.mxu0 0.0
        %1132 = vmatpush1.msra.mxu0 0.0
        %1133 = vmatprep.subr.mxu0 0.0
        %1134 = vmatpush1.msra.mxu0 0.0
        %1135 = vmatprep.subr.mxu0 0.0
        %1136 = vmatpush1.msra.mxu0 0.0
        %1137 = vmatprep.subr.mxu0 0.0
        %1138 = vmatpush1.msra.mxu0 0.0
        %1139 = vmatprep.subr.mxu0 0.0
        %1140 = vmatpush1.msra.mxu0 0.0
        %1141 = vmatprep.subr.mxu0 0.0
        %1142 = vmatpush1.msra.mxu0 0.0
        %1143 = vmatprep.subr.mxu0 0.0
        %1144 = vmatpush1.msra.mxu0 0.0
        %1145 = vmatprep.subr.mxu0 0.0
        %1146 = vmatpush1.msra.mxu0 0.0
        %1147 = vmatprep.subr.mxu0 0.0
        %1148 = vmatpush1.msra.mxu0 0.0
        %1149 = vmatprep.subr.mxu0 0.0
        %1150 = vmatpush1.msra.mxu0 0.0
        %1151 = vmatprep.subr.mxu0 0.0
        %1152 = vmatpush1.msra.mxu0 0.0
        %1153 = vmatprep.subr.mxu0 0.0
        %1154 = vmatpush1.msra.mxu0 0.0
        %1155 = vmatprep.subr.mxu0 0.0
        %1156 = vmatpush1.msra.mxu0 0.0
        %1157 = vmatprep.subr.mxu0 0.0
        %1158 = vmatpush1.msra.mxu0 0.0
        %1159 = vmatprep.subr.mxu0 0.0
        %1160 = vmatpush1.msra.mxu0 0.0
        %1161 = vmatprep.subr.mxu0 0.0
        %1162 = vmatpush1.msra.mxu0 0.0
        %1163 = vmatprep.mubr.f32.mxu0 0.0
        %1164 = vmatmul.mubr.f32.gmra.mrb[0].mxu0 %v993
        %v1165 = vpop.f32.mrb[0].mxu0
        %v1166 = vadd.f32 %v1096, %v1165
        %v1167 = vpop.f32.mrb[0].mxu0
        %1168 = vdwg.mxu0
        %s1169 = scalar_lea.vmem [#allocation8], 16
        %v1170 = vld [vmem:[%s1169] sm:$0xff]
        %v1172 = vsel %vm922, %v1170, 0
        %1174 = vmatprep.subr.mxu0 0.0
        %1175 = vmatpush1.msra.mxu0 %v920
        %1176 = vmatprep.subr.mxu0 0.0
        %1177 = vmatpush1.msra.mxu0 0.0
        %1178 = vmatprep.subr.mxu0 0.0
        %1179 = vmatpush1.msra.mxu0 0.0
        %1180 = vmatprep.subr.mxu0 0.0
        %1181 = vmatpush1.msra.mxu0 0.0
        %1182 = vmatprep.subr.mxu0 0.0
        %1183 = vmatpush1.msra.mxu0 0.0
        %1184 = vmatprep.subr.mxu0 0.0
        %1185 = vmatpush1.msra.mxu0 0.0
        %1186 = vmatprep.subr.mxu0 0.0
        %1187 = vmatpush1.msra.mxu0 0.0
        %1188 = vmatprep.subr.mxu0 0.0
        %1189 = vmatpush1.msra.mxu0 0.0
        %1190 = vmatprep.subr.mxu0 0.0
        %1191 = vmatpush1.msra.mxu0 0.0
        %1192 = vmatprep.subr.mxu0 0.0
        %1193 = vmatpush1.msra.mxu0 0.0
        %1194 = vmatprep.subr.mxu0 0.0
        %1195 = vmatpush1.msra.mxu0 0.0
        %1196 = vmatprep.subr.mxu0 0.0
        %1197 = vmatpush1.msra.mxu0 0.0
        %1198 = vmatprep.subr.mxu0 0.0
        %1199 = vmatpush1.msra.mxu0 0.0
        %1200 = vmatprep.subr.mxu0 0.0
        %1201 = vmatpush1.msra.mxu0 0.0
        %1202 = vmatprep.subr.mxu0 0.0
        %1203 = vmatpush1.msra.mxu0 0.0
        %1204 = vmatprep.subr.mxu0 0.0
        %1205 = vmatpush1.msra.mxu0 0.0
        %1206 = vmatprep.subr.mxu0 0.0
        %1207 = vmatpush1.msra.mxu0 0.0
        %1208 = vmatprep.subr.mxu0 0.0
        %1209 = vmatpush1.msra.mxu0 0.0
        %1210 = vmatprep.subr.mxu0 0.0
        %1211 = vmatpush1.msra.mxu0 0.0
        %1212 = vmatprep.subr.mxu0 0.0
        %1213 = vmatpush1.msra.mxu0 0.0
        %1214 = vmatprep.subr.mxu0 0.0
        %1215 = vmatpush1.msra.mxu0 0.0
        %1216 = vmatprep.subr.mxu0 0.0
        %1217 = vmatpush1.msra.mxu0 0.0
        %1218 = vmatprep.subr.mxu0 0.0
        %1219 = vmatpush1.msra.mxu0 0.0
        %1220 = vmatprep.subr.mxu0 0.0
        %1221 = vmatpush1.msra.mxu0 0.0
        %1222 = vmatprep.subr.mxu0 0.0
        %1223 = vmatpush1.msra.mxu0 0.0
        %1224 = vmatprep.subr.mxu0 0.0
        %1225 = vmatpush1.msra.mxu0 0.0
        %1226 = vmatprep.subr.mxu0 0.0
        %1227 = vmatpush1.msra.mxu0 0.0
        %1228 = vmatprep.subr.mxu0 0.0
        %1229 = vmatpush1.msra.mxu0 0.0
        %1230 = vmatprep.subr.mxu0 0.0
        %1231 = vmatpush1.msra.mxu0 0.0
        %1232 = vmatprep.subr.mxu0 0.0
        %1233 = vmatpush1.msra.mxu0 0.0
        %1234 = vmatprep.subr.mxu0 0.0
        %1235 = vmatpush1.msra.mxu0 0.0
        %1236 = vmatprep.subr.mxu0 0.0
        %1237 = vmatpush1.msra.mxu0 0.0
        %1238 = vmatprep.mubr.f32.mxu0 0.0
        %1239 = vmatmul.mubr.f32.gmra.mrb[0].mxu0 %v1172
        %v1240 = vpop.f32.mrb[0].mxu0
        %v1241 = vadd.f32 0.0, %v1240
        %v1242 = vpop.f32.mrb[0].mxu0
        %1243 = vdwg.mxu0
        %s1244 = scalar_lea.vmem [#allocation10], 256
        %v1245 = vld [vmem:[%s1244] sm:$0xff]
        %v1246 = vld [vmem:[%s1244 + $0x8] sm:$0xff]
        %v1247 = vld [vmem:[%s1244 + $0x10] sm:$0xff]
        %v1248 = vld [vmem:[%s1244 + $0x18] sm:$0xff]
        %v1249 = vld [vmem:[%s1244 + $0x20] sm:$0xff]
        %v1250 = vld [vmem:[%s1244 + $0x28] sm:$0xff]
        %v1251 = vld [vmem:[%s1244 + $0x30] sm:$0xff]
        %v1252 = vld [vmem:[%s1244 + $0x38] sm:$0xff]
        %v1253 = vld [vmem:[%s1244 + $0x40] sm:$0xff]
        %v1254 = vld [vmem:[%s1244 + $0x48] sm:$0xff]
        %v1255 = vld [vmem:[%s1244 + $0x50] sm:$0xff]
        %v1256 = vld [vmem:[%s1244 + $0x58] sm:$0xff]
        %v1257 = vld [vmem:[%s1244 + $0x60] sm:$0xff]
        %v1258 = vld [vmem:[%s1244 + $0x68] sm:$0xff]
        %v1259 = vld [vmem:[%s1244 + $0x70] sm:$0xff]
        %v1260 = vld [vmem:[%s1244 + $0x78] sm:$0xff]
        %1261 = vmatprep.subr.mxu0 0.0
        %1262 = vmatpush1.msra.mxu0 %v1245
        %1263 = vmatprep.subr.mxu0 0.0
        %1264 = vmatpush1.msra.mxu0 %v1246
        %1265 = vmatprep.subr.mxu0 0.0
        %1266 = vmatpush1.msra.mxu0 %v1247
        %1267 = vmatprep.subr.mxu0 0.0
        %1268 = vmatpush1.msra.mxu0 %v1248
        %1269 = vmatprep.subr.mxu0 0.0
        %1270 = vmatpush1.msra.mxu0 %v1249
        %1271 = vmatprep.subr.mxu0 0.0
        %1272 = vmatpush1.msra.mxu0 %v1250
        %1273 = vmatprep.subr.mxu0 0.0
        %1274 = vmatpush1.msra.mxu0 %v1251
        %1275 = vmatprep.subr.mxu0 0.0
        %1276 = vmatpush1.msra.mxu0 %v1252
        %1277 = vmatprep.subr.mxu0 0.0
        %1278 = vmatpush1.msra.mxu0 %v1253
        %1279 = vmatprep.subr.mxu0 0.0
        %1280 = vmatpush1.msra.mxu0 %v1254
        %1281 = vmatprep.subr.mxu0 0.0
        %1282 = vmatpush1.msra.mxu0 %v1255
        %1283 = vmatprep.subr.mxu0 0.0
        %1284 = vmatpush1.msra.mxu0 %v1256
        %1285 = vmatprep.subr.mxu0 0.0
        %1286 = vmatpush1.msra.mxu0 %v1257
        %1287 = vmatprep.subr.mxu0 0.0
        %1288 = vmatpush1.msra.mxu0 %v1258
        %1289 = vmatprep.subr.mxu0 0.0
        %1290 = vmatpush1.msra.mxu0 %v1259
        %1291 = vmatprep.subr.mxu0 0.0
        %1292 = vmatpush1.msra.mxu0 %v1260
        %1293 = vmatprep.subr.mxu0 0.0
        %1294 = vmatpush1.msra.mxu0 0.0
        %1295 = vmatprep.subr.mxu0 0.0
        %1296 = vmatpush1.msra.mxu0 0.0
        %1297 = vmatprep.subr.mxu0 0.0
        %1298 = vmatpush1.msra.mxu0 0.0
        %1299 = vmatprep.subr.mxu0 0.0
        %1300 = vmatpush1.msra.mxu0 0.0
        %1301 = vmatprep.subr.mxu0 0.0
        %1302 = vmatpush1.msra.mxu0 0.0
        %1303 = vmatprep.subr.mxu0 0.0
        %1304 = vmatpush1.msra.mxu0 0.0
        %1305 = vmatprep.subr.mxu0 0.0
        %1306 = vmatpush1.msra.mxu0 0.0
        %1307 = vmatprep.subr.mxu0 0.0
        %1308 = vmatpush1.msra.mxu0 0.0
        %1309 = vmatprep.subr.mxu0 0.0
        %1310 = vmatpush1.msra.mxu0 0.0
        %1311 = vmatprep.subr.mxu0 0.0
        %1312 = vmatpush1.msra.mxu0 0.0
        %1313 = vmatprep.subr.mxu0 0.0
        %1314 = vmatpush1.msra.mxu0 0.0
        %1315 = vmatprep.subr.mxu0 0.0
        %1316 = vmatpush1.msra.mxu0 0.0
        %1317 = vmatprep.subr.mxu0 0.0
        %1318 = vmatpush1.msra.mxu0 0.0
        %1319 = vmatprep.subr.mxu0 0.0
        %1320 = vmatpush1.msra.mxu0 0.0
        %1321 = vmatprep.subr.mxu0 0.0
        %1322 = vmatpush1.msra.mxu0 0.0
        %1323 = vmatprep.subr.mxu0 0.0
        %1324 = vmatpush1.msra.mxu0 0.0
        %1325 = vmatprep.mubr.f32.mxu0 0.0
        %1326 = vmatmul.mubr.f32.gmra.mrb[0].mxu0 %v1241
        %v1327 = vpop.f32.mrb[0].mxu0
        %v1328 = vadd.f32 0.0, %v1327
        %v1329 = vpop.f32.mrb[0].mxu0
        %1330 = vdwg.mxu0
        %v1331 = vadd.f32 %v1166, %v1328
        %v1332 = vld [vmem:[%s6] sm:$0x1]
        %v1334 = vlaneseq
        %v1335 = vshrl.u32 %v1334, 7
        %v1336 = vsub.s32 0, %v1335
        %v1337 = vrot.slane %v1332, %v1336
        %v1339 = vadd.f32 %v1331, %v1337
        %v1340 = vmax.f32 %v1339, 0.0
        %v1341 = vld [vmem:[#allocation11] sm:$0xff]
        %v1342 = vld [vmem:[#allocation11 + $0x8] sm:$0xff]
        %v1343 = vld [vmem:[#allocation11 + $0x10] sm:$0xff]
        %v1344 = vld [vmem:[#allocation11 + $0x18] sm:$0xff]
        %v1345 = vld [vmem:[#allocation11 + $0x20] sm:$0xff]
        %v1346 = vld [vmem:[#allocation11 + $0x28] sm:$0xff]
        %v1347 = vld [vmem:[#allocation11 + $0x30] sm:$0xff]
        %v1348 = vld [vmem:[#allocation11 + $0x38] sm:$0xff]
        %v1349 = vld [vmem:[#allocation11 + $0x40] sm:$0xff]
        %v1350 = vld [vmem:[#allocation11 + $0x48] sm:$0xff]
        %v1351 = vld [vmem:[#allocation11 + $0x50] sm:$0xff]
        %v1352 = vld [vmem:[#allocation11 + $0x58] sm:$0xff]
        %v1353 = vld [vmem:[#allocation11 + $0x60] sm:$0xff]
        %v1354 = vld [vmem:[#allocation11 + $0x68] sm:$0xff]
        %v1355 = vld [vmem:[#allocation11 + $0x70] sm:$0xff]
        %v1356 = vld [vmem:[#allocation11 + $0x78] sm:$0xff]
        %v1357 = vld [vmem:[%s8] sm:$0x1]
        %v1359 = vlaneseq
        %v1360 = vshrl.u32 %v1359, 7
        %v1361 = vsub.s32 0, %v1360
        %v1362 = vrot.slane %v1357, %v1361
        %1364 = vmatprep.subr.mxu0 0.0
        %1365 = vmatpush1.msra.mxu0 %v1341
        %1366 = vmatprep.subr.mxu0 0.0
        %1367 = vmatpush1.msra.mxu0 %v1342
        %1368 = vmatprep.subr.mxu0 0.0
        %1369 = vmatpush1.msra.mxu0 %v1343
        %1370 = vmatprep.subr.mxu0 0.0
        %1371 = vmatpush1.msra.mxu0 %v1344
        %1372 = vmatprep.subr.mxu0 0.0
        %1373 = vmatpush1.msra.mxu0 %v1345
        %1374 = vmatprep.subr.mxu0 0.0
        %1375 = vmatpush1.msra.mxu0 %v1346
        %1376 = vmatprep.subr.mxu0 0.0
        %1377 = vmatpush1.msra.mxu0 %v1347
        %1378 = vmatprep.subr.mxu0 0.0
        %1379 = vmatpush1.msra.mxu0 %v1348
        %1380 = vmatprep.subr.mxu0 0.0
        %1381 = vmatpush1.msra.mxu0 %v1349
        %1382 = vmatprep.subr.mxu0 0.0
        %1383 = vmatpush1.msra.mxu0 %v1350
        %1384 = vmatprep.subr.mxu0 0.0
        %1385 = vmatpush1.msra.mxu0 %v1351
        %1386 = vmatprep.subr.mxu0 0.0
        %1387 = vmatpush1.msra.mxu0 %v1352
        %1388 = vmatprep.subr.mxu0 0.0
        %1389 = vmatpush1.msra.mxu0 %v1353
        %1390 = vmatprep.subr.mxu0 0.0
        %1391 = vmatpush1.msra.mxu0 %v1354
        %1392 = vmatprep.subr.mxu0 0.0
        %1393 = vmatpush1.msra.mxu0 %v1355
        %1394 = vmatprep.subr.mxu0 0.0
        %1395 = vmatpush1.msra.mxu0 %v1356
        %1396 = vmatprep.subr.mxu0 0.0
        %1397 = vmatpush1.msra.mxu0 0.0
        %1398 = vmatprep.subr.mxu0 0.0
        %1399 = vmatpush1.msra.mxu0 0.0
        %1400 = vmatprep.subr.mxu0 0.0
        %1401 = vmatpush1.msra.mxu0 0.0
        %1402 = vmatprep.subr.mxu0 0.0
        %1403 = vmatpush1.msra.mxu0 0.0
        %1404 = vmatprep.subr.mxu0 0.0
        %1405 = vmatpush1.msra.mxu0 0.0
        %1406 = vmatprep.subr.mxu0 0.0
        %1407 = vmatpush1.msra.mxu0 0.0
        %1408 = vmatprep.subr.mxu0 0.0
        %1409 = vmatpush1.msra.mxu0 0.0
        %1410 = vmatprep.subr.mxu0 0.0
        %1411 = vmatpush1.msra.mxu0 0.0
        %1412 = vmatprep.subr.mxu0 0.0
        %1413 = vmatpush1.msra.mxu0 0.0
        %1414 = vmatprep.subr.mxu0 0.0
        %1415 = vmatpush1.msra.mxu0 0.0
        %1416 = vmatprep.subr.mxu0 0.0
        %1417 = vmatpush1.msra.mxu0 0.0
        %1418 = vmatprep.subr.mxu0 0.0
        %1419 = vmatpush1.msra.mxu0 0.0
        %1420 = vmatprep.subr.mxu0 0.0
        %1421 = vmatpush1.msra.mxu0 0.0
        %1422 = vmatprep.subr.mxu0 0.0
        %1423 = vmatpush1.msra.mxu0 0.0
        %1424 = vmatprep.subr.mxu0 0.0
        %1425 = vmatpush1.msra.mxu0 0.0
        %1426 = vmatprep.subr.mxu0 0.0
        %1427 = vmatpush1.msra.mxu0 0.0
        %1428 = vmatprep.mubr.f32.mxu0 0.0
        %1429 = vmatmul.mubr.f32.gmra.mrb[0].mxu0 %v589
        %v1430 = vpop.f32.mrb[0].mxu0
        %v1431 = vadd.f32 %v1362, %v1430
        %v1432 = vpop.f32.mrb[0].mxu0
        %1433 = vdwg.mxu0
        %v1434 = vadd.f32 %v1340, %v1431
        %1435 = vst [vmem:[%s423] sm:$0xff] %v1434
        %s1436 = sand.u32 %s231, 1
        %s1437 = scalar_lea.sflag [#allocation4], %s1436
        %s1438 = sand.u32 %s231, 1
        %s1439 = smul.addr %s1438, 8
        %s1440 = scalar_lea.vmem [#allocation13], %s1439
        // Predicated region
        $region81: #{tpu_custom_call.1} parent=55 // pred_check
          %p1441 = pneg %p241
        $region82: #{tpu_custom_call.1} parent=55 // pred_check_branch
          %1443 = sbr.rel (%p1441) target = $region84
        $region83: #{tpu_custom_call.1} parent=55 // pred_region
          %s1445 = ssub.s32 128, 128
          %1446 = vsyncadd %s1437, %s1445
          %s1447 = smul.addr %s29, 128
          %s1448 = scalar_lea.hbm %s9, %s1447
          %s1450 = sshll.u32 %s1440, 4
          %s1451 = int_to_ptr.vmem [resolvable:$true] %s1450
          %1453 = dma.vmem_to_hbm [thread:$0]  %s1451, 128, %s1448, %s1437
        $region84: #{tpu_custom_call.1} parent=55 // pred_fallthru
          _
      $region56: #{tpu_custom_call.1} parent=5 // pred_fallthru
        _
      %p1454 = scmp.le.s32.totalorder 2, %s24
      // Predicated region
      $region85: #{tpu_custom_call.1} parent=5 // pred_check
        %p1455 = pneg %p1454
      $region86: #{tpu_custom_call.1} parent=5 // pred_check_branch
        %1457 = sbr.rel (%p1455) target = $region88
      $region87: #{tpu_custom_call.1} parent=5 // pred_region
        %s1458 = ssub.s32 %s24, 2
        // Predicated region
        $region89: #{tpu_custom_call.1} parent=87 // pred_check
          %p1459 = pneg %p247
        $region90: #{tpu_custom_call.1} parent=87 // pred_check_branch
          %1461 = sbr.rel (%p1459) target = $region92
        $region91: #{tpu_custom_call.1} parent=87 // pred_region
          %s1462 = sand.u32 %s232, 1
          %s1463 = scalar_lea.sflag [#allocation4], %s1462
          %s1464 = sand.u32 %s232, 1
          %s1465 = smul.addr %s1464, 8
          %s1466 = scalar_lea.vmem [#allocation13], %s1465
          %1467 = dma.done %s1463, 128
        $region92: #{tpu_custom_call.1} parent=87 // pred_fallthru
          _
      $region88: #{tpu_custom_call.1} parent=5 // pred_fallthru
        _
    $region6: #{tpu_custom_call.1} parent=1 // loop_footer
      %s28 = sadd.s32 1, %s24
    $region7: #{tpu_custom_call.1} parent=1 // loop_footer_branch
      %23 = sbr.rel target = $region3
    $region8: #{tpu_custom_call.1} parent=1 // loop_exit
      _
    %1468 = vsyncpa [#allocation3], 1
    %s1469 = scalar_lea.sflag [#allocation3], 1
    %1470 = vsyncpa %s1469, 1
    %1471 = vsyncpa [#allocation6], 1
    %1472 = vsyncpa [#allocation9], 1
    %1473 = vsyncpa [#allocation12], 1
    %1474 = vsyncpa [#allocation4], 1
    %s1475 = scalar_lea.sflag [#allocation4], 1
    %1476 = vsyncpa %s1475, 1

</llo_original>
